<compile_context>
chip_gen: v7x
topology: tpu7x:2x2x1
jax: 0.10.0
libtpu: 0.0.40
codegen_flags: <defaults>
</compile_context>

<pallas_src>
import functools

import jax
import jax.numpy as jnp
from jax.experimental import pallas as pl
from jax.experimental.pallas import tpu as pltpu

INPUT_SIZE = 784
HIDDEN_SIZE = 500
NUM_CLASSES = 10

HIDDEN_PAD = 512   # 500 -> 512  (multiple of 128)
CLASSES_PAD = 128  # 10  -> 128  (lane-dense output)


def _mlp_kernel(x_ref, w1_ref, b1_ref, w2_ref, b2_ref, o_ref):
    # In-kernel f32 -> bf16 cast of the streamed activations (rides the VPU
    # slot underneath the MXU work; avoids a separate wrapper cast pass).
    x = x_ref[...].astype(jnp.bfloat16)
    # fc1: [TILE_B, 784](bf16) @ [784, 512](bf16) -> f32 accum on the MXU.
    h = jnp.dot(x, w1_ref[...], preferred_element_type=jnp.float32)
    # bias + ReLU in f32 on the VPU (padded hidden columns are exactly zero).
    h = jnp.maximum(h + b1_ref[...], 0.0)
    # fc2: [TILE_B, 512](bf16) @ [512, 128](bf16) -> f32 accum.
    out = jnp.dot(h.astype(jnp.bfloat16), w2_ref[...],
                  preferred_element_type=jnp.float32)
    o_ref[...] = (out + b2_ref[...]).astype(o_ref.dtype)


def _choose_tile_b(batch, *, max_tile_b=512, align=16):
    """Pick a batch tile: big enough to amortize per-grid-step overhead,
    aligned to 16 rows, and capped so there are >= 2 grid steps whenever the
    (aligned) batch can be split -- keeps both v7x TensorCores busy."""
    b_aligned = pl.cdiv(max(batch, 1), align) * align
    half = (b_aligned // 2) // align * align
    if half >= align:
        tile = min(max_tile_b, half)
    else:
        tile = b_aligned                     # batch too small to split
    return max(align, min(tile, max_tile_b))


def prepare_params(w1, b1, w2, b2):
    """Pad + cast parameters ONCE (call at init, not per forward step).

    w1: [784, 500], b1: [1, 500], w2: [500, 10], b2: [1, 10] (all f32,
    already stored as [in, out]).  Zero padding keeps padded units exact:
    ReLU(0 + 0) = 0 and the corresponding w2 rows are zero."""
    w1_p = jnp.pad(w1, ((0, 0), (0, HIDDEN_PAD - HIDDEN_SIZE))).astype(jnp.bfloat16)
    b1_p = jnp.pad(b1, ((0, 0), (0, HIDDEN_PAD - HIDDEN_SIZE))).astype(jnp.float32)
    w2_p = jnp.pad(w2, ((0, HIDDEN_PAD - HIDDEN_SIZE),
                        (0, CLASSES_PAD - NUM_CLASSES))).astype(jnp.bfloat16)
    b2_p = jnp.pad(b2, ((0, 0), (0, CLASSES_PAD - NUM_CLASSES))).astype(jnp.float32)
    return w1_p, b1_p, w2_p, b2_p


@functools.partial(jax.jit, static_argnames=("max_tile_b",))
def simple_dnn_forward(x, w1_p, b1_p, w2_p, b2_p, *, max_tile_b=512):
    """x: [B, 784] float32; padded params from `prepare_params`.
    Returns logits [B, 10] float32."""
    B = x.shape[0]
    tile_b = _choose_tile_b(B, max_tile_b=max_tile_b)
    b_pad = pl.cdiv(B, tile_b) * tile_b

    # Only pad the batch when needed; no dtype conversion in the wrapper.
    x_p = x if b_pad == B else jnp.pad(x, ((0, b_pad - B), (0, 0)))
    x_p = x_p.astype(jnp.float32)

    grid = (b_pad // tile_b,)

    flops = 2 * b_pad * (INPUT_SIZE * HIDDEN_PAD + HIDDEN_PAD * CLASSES_PAD)
    bytes_accessed = (x_p.size * 4                      # f32 activations in
                      + w1_p.size * 2 + w2_p.size * 2   # bf16 weights
                      + b1_p.size * 4 + b2_p.size * 4   # f32 biases
                      + b_pad * CLASSES_PAD * 4)        # f32 logits out

    out = pl.pallas_call(
        _mlp_kernel,
        out_shape=jax.ShapeDtypeStruct((b_pad, CLASSES_PAD), jnp.float32),
        grid=grid,
        in_specs=[
            # x tile marches over the batch; weights/biases use constant
            # index maps and stay VMEM-resident across grid steps.
            pl.BlockSpec((tile_b, INPUT_SIZE), lambda i: (i, 0)),
            pl.BlockSpec((INPUT_SIZE, HIDDEN_PAD), lambda i: (0, 0)),
            pl.BlockSpec((1, HIDDEN_PAD), lambda i: (0, 0)),
            pl.BlockSpec((HIDDEN_PAD, CLASSES_PAD), lambda i: (0, 0)),
            pl.BlockSpec((1, CLASSES_PAD), lambda i: (0, 0)),
        ],
        out_specs=pl.BlockSpec((tile_b, CLASSES_PAD), lambda i: (i, 0)),
        compiler_params=pltpu.CompilerParams(
            dimension_semantics=("parallel",),
        ),
        cost_estimate=pl.CostEstimate(
            flops=flops, transcendentals=0, bytes_accessed=bytes_accessed),
    )(x_p, w1_p, b1_p, w2_p, b2_p)

    # Slice away the batch / class padding outside the kernel.
    return out[:B, :NUM_CLASSES]


def init_params(key):
    """Deterministic init mimicking nn.Linear defaults (U(-1/sqrt(fan_in), +))."""
    k1, k2, k3, k4 = jax.random.split(key, 4)
    bound1 = 1.0 / jnp.sqrt(INPUT_SIZE)
    bound2 = 1.0 / jnp.sqrt(HIDDEN_SIZE)
    # Stored already transposed: [in, out]
    w1 = jax.random.uniform(k1, (INPUT_SIZE, HIDDEN_SIZE), jnp.float32,
                            -bound1, bound1)
    b1 = jax.random.uniform(k2, (1, HIDDEN_SIZE), jnp.float32, -bound1, bound1)
    w2 = jax.random.uniform(k3, (HIDDEN_SIZE, NUM_CLASSES), jnp.float32,
                            -bound2, bound2)
    b2 = jax.random.uniform(k4, (1, NUM_CLASSES), jnp.float32, -bound2, bound2)
    return w1, b1, w2, b2


if __name__ == "__main__":
    key = jax.random.PRNGKey(0)
    kx, kp = jax.random.split(key)
    batch = 8
    x = jax.random.normal(kx, (batch, INPUT_SIZE), jnp.float32)
    w1, b1, w2, b2 = init_params(kp)

    # Pad / cast parameters once (outside the forward path).
    params = prepare_params(w1, b1, w2, b2)
    params = jax.block_until_ready(params)

    out = simple_dnn_forward(x, *params)
    out = jax.block_until_ready(out)
    assert out.shape == (batch, NUM_CLASSES)

    # Pure-JAX reference with matching bf16 matmul inputs / f32 accumulation.
    xb, w1b, w2b = (a.astype(jnp.bfloat16) for a in (x, w1, w2))
    h_ref = jnp.maximum(
        jnp.dot(xb, w1b, preferred_element_type=jnp.float32) + b1, 0.0)
    ref = jnp.dot(h_ref.astype(jnp.bfloat16), w2b,
                  preferred_element_type=jnp.float32) + b2
    assert jnp.allclose(out, ref, atol=2e-2, rtol=2e-2)

    # Looser sanity check vs the full-f32 reference (bf16 rounding ~1e-2 rel).
    ref_f32 = jnp.maximum(x @ w1 + b1, 0.0) @ w2 + b2
    assert jnp.allclose(out, ref_f32, atol=5e-2, rtol=5e-2)

    print("KERNEL_OK")
</pallas_src>

<mosaic_0001>
module attributes {stable_mosaic.version = 11 : i64} {
  func.func @_mlp_kernel(%arg0: i32, %arg1: memref<16x784xf32, #tpu.memory_space<vmem>>, %arg2: memref<784x512xbf16, #tpu.memory_space<vmem>>, %arg3: memref<1x512xf32, #tpu.memory_space<vmem>>, %arg4: memref<512x128xbf16, #tpu.memory_space<vmem>>, %arg5: memref<1x128xf32, #tpu.memory_space<vmem>>, %arg6: memref<16x128xf32, #tpu.memory_space<vmem>>) attributes {dimension_semantics = [#tpu.dimension_semantics<parallel>], iteration_bounds = array<i64: 1>, scalar_prefetch = 0 : i64, scratch_operands = 0 : i64, tpu.core_type = #tpu.core_type<tc>, window_params = [{transform_indices = @transform_0, window_bounds = array<i64: 16, 784>}, {pipeline_mode = #tpu.pipeline_mode<synchronous>, transform_indices = @transform_1, window_bounds = array<i64: 784, 512>}, {pipeline_mode = #tpu.pipeline_mode<synchronous>, transform_indices = @transform_2, window_bounds = array<i64: 1, 512>}, {pipeline_mode = #tpu.pipeline_mode<synchronous>, transform_indices = @transform_3, window_bounds = array<i64: 512, 128>}, {pipeline_mode = #tpu.pipeline_mode<synchronous>, transform_indices = @transform_4, window_bounds = array<i64: 1, 128>}, {transform_indices = @transform_5, window_bounds = array<i64: 16, 128>}]} {
    %c0 = arith.constant 0 : index
    %c0_0 = arith.constant 0 : index
    %0 = vector.load %arg1[%c0, %c0_0] : memref<16x784xf32, #tpu.memory_space<vmem>>, vector<16x784xf32>
    %1 = arith.truncf %0 : vector<16x784xf32> to vector<16x784xbf16>
    %c0_1 = arith.constant 0 : index
    %c0_2 = arith.constant 0 : index
    %2 = vector.load %arg2[%c0_1, %c0_2] : memref<784x512xbf16, #tpu.memory_space<vmem>>, vector<784x512xbf16>
    %cst = arith.constant dense<0.000000e+00> : vector<16x512xf32>
    %3 = tpu.matmul %1, %2, %cst {dimension_numbers = #tpu.dot_dimension_numbers<[1], [0], [0], [1], [0, 0, 1, 1], [], []>} : vector<16x784xbf16>, vector<784x512xbf16>, vector<16x512xf32> -> vector<16x512xf32>
    %c0_3 = arith.constant 0 : index
    %c0_4 = arith.constant 0 : index
    %4 = vector.load %arg3[%c0_3, %c0_4] : memref<1x512xf32, #tpu.memory_space<vmem>>, vector<1x512xf32>
    %5 = vector.broadcast %4 : vector<1x512xf32> to vector<16x512xf32>
    %6 = arith.addf %3, %5 : vector<16x512xf32>
    %cst_5 = arith.constant 0.000000e+00 : f32
    %7 = vector.broadcast %cst_5 : f32 to vector<16x512xf32>
    %8 = arith.maximumf %6, %7 : vector<16x512xf32>
    %9 = arith.truncf %8 : vector<16x512xf32> to vector<16x512xbf16>
    %c0_6 = arith.constant 0 : index
    %c0_7 = arith.constant 0 : index
    %10 = vector.load %arg4[%c0_6, %c0_7] : memref<512x128xbf16, #tpu.memory_space<vmem>>, vector<512x128xbf16>
    %cst_8 = arith.constant dense<0.000000e+00> : vector<16x128xf32>
    %11 = tpu.matmul %9, %10, %cst_8 {dimension_numbers = #tpu.dot_dimension_numbers<[1], [0], [0], [1], [0, 0, 1, 1], [], []>} : vector<16x512xbf16>, vector<512x128xbf16>, vector<16x128xf32> -> vector<16x128xf32>
    %c0_9 = arith.constant 0 : index
    %c0_10 = arith.constant 0 : index
    %12 = vector.load %arg5[%c0_9, %c0_10] : memref<1x128xf32, #tpu.memory_space<vmem>>, vector<1x128xf32>
    %13 = vector.broadcast %12 : vector<1x128xf32> to vector<16x128xf32>
    %14 = arith.addf %11, %13 : vector<16x128xf32>
    %c0_11 = arith.constant 0 : index
    %c0_12 = arith.constant 0 : index
    %15 = vector.load %arg6[%c0_11, %c0_12] : memref<16x128xf32, #tpu.memory_space<vmem>>, vector<16x128xf32>
    tpu.vector_store %arg6[%c0_11, %c0_12], %14 {strides = array<i32>} : memref<16x128xf32, #tpu.memory_space<vmem>>, vector<16x128xf32>,
    return
  }
  func.func @transform_0(%arg0: i32) -> (i32, i32) {
    %c0_i32 = arith.constant 0 : i32
    %c0_i32_0 = arith.constant 0 : i32
    return %arg0, %c0_i32 : i32, i32
  }
  func.func @transform_1(%arg0: i32) -> (i32, i32) {
    %c0_i32 = arith.constant 0 : i32
    %c0_i32_0 = arith.constant 0 : i32
    %c0_i32_1 = arith.constant 0 : i32
    return %c0_i32, %c0_i32_0 : i32, i32
  }
  func.func @transform_2(%arg0: i32) -> (i32, i32) {
    %c0_i32 = arith.constant 0 : i32
    %c0_i32_0 = arith.constant 0 : i32
    %c0_i32_1 = arith.constant 0 : i32
    return %c0_i32, %c0_i32_0 : i32, i32
  }
  func.func @transform_3(%arg0: i32) -> (i32, i32) {
    %c0_i32 = arith.constant 0 : i32
    %c0_i32_0 = arith.constant 0 : i32
    %c0_i32_1 = arith.constant 0 : i32
    return %c0_i32, %c0_i32_0 : i32, i32
  }
  func.func @transform_4(%arg0: i32) -> (i32, i32) {
    %c0_i32 = arith.constant 0 : i32
    %c0_i32_0 = arith.constant 0 : i32
    %c0_i32_1 = arith.constant 0 : i32
    return %c0_i32, %c0_i32_0 : i32, i32
  }
  func.func @transform_5(%arg0: i32) -> (i32, i32) {
    %c0_i32 = arith.constant 0 : i32
    %c0_i32_0 = arith.constant 0 : i32
    return %arg0, %c0_i32 : i32, i32
  }
}

</mosaic_0001>

<llo_original>
// kernel: simple_dnn_forward.1
$region0: #{simple_dnn_forward.1}
  #allocation0 [shape = 'u32[]', space=smem, size = 0x4, offset = 0x4, fixed_abs, tag = 'smem constant byte address 0x4 - core index']
  #allocation1 [shape = 'u32[144,128]{1,0:T(1,128)}', space=vmem, size = 0x12000, scoped, tag = 'internal scratch']
  %s0 = inlined_call_operand.vmem [shape: f32[16,784], index: 0, kind: input, shape index: {}]
  %s1 = inlined_call_operand.hbm [shape: bf16[784,512], index: 1, kind: input, shape index: {}]
  %s2 = inlined_call_operand.vmem [shape: f32[1,512], index: 2, kind: input, shape index: {}]
  %s3 = inlined_call_operand.hbm [shape: bf16[512,128], index: 3, kind: input, shape index: {}]
  %s4 = inlined_call_operand.vmem [shape: f32[1,128], index: 4, kind: input, shape index: {}]
  %s5 = inlined_call_operand.vmem [shape: f32[16,128], index: 5, kind: output, shape index: {}]
  %s6 = sld [smem:[#allocation0]]
  $region38: #{simple_dnn_forward.1} parent=0
    _
  %s8 = ssub.s32 1, %s6
  %s9 = scalar_select 0, %s8, %s6
  $region1: #{simple_dnn_forward.1} parent=0
    #allocation2 [shape = 'u8[802816]{0}', space=vmem, size = 0xc4000, scoped, tag = 'input window, operand 1, single buffered']
    #allocation3 [shape = 's32[1]{0}', space=sflag, size = 0x4, scoped, tag = 'scoped memory for simple_dnn_forward.1']
    #allocation4 [shape = 'u8[131072]{0}', space=vmem, size = 0x20000, scoped, tag = 'input window, operand 3, single buffered']
    #allocation5 [shape = 's32[1]{0}', space=sflag, size = 0x4, scoped, tag = 'scoped memory for simple_dnn_forward.1']
    %10 = vsyncpa [#allocation3], 0
    %11 = vsyncpa [#allocation5], 0
    // Predicated region
    $region2: #{simple_dnn_forward.1} parent=1 // pred_check
      _
    $region3: #{simple_dnn_forward.1} parent=1 // pred_check_branch
      %13 = sbr.rel (0) target = $region5
    $region4: #{simple_dnn_forward.1} parent=1 // pred_region
      _
    $region5: #{simple_dnn_forward.1} parent=1 // pred_fallthru
      _
    // Predicated region
    $region6: #{simple_dnn_forward.1} parent=1 // pred_check
      _
    $region7: #{simple_dnn_forward.1} parent=1 // pred_check_branch
      %15 = sbr.rel (0) target = $region9
    $region8: #{simple_dnn_forward.1} parent=1 // pred_region
      %s17 = ssub.s32 25088, 25088
      %18 = vsyncadd [#allocation3], %s17
      %s19 = sshll.u32 [#allocation2], 4
      %s20 = int_to_ptr.vmem [resolvable:$true] %s19
      %25 = dma.hbm_to_vmem [thread:$0]  %s1, 25088, %s20, [#allocation3], 256, 256, 16
    $region9: #{simple_dnn_forward.1} parent=1 // pred_fallthru
      _
    // Predicated region
    $region10: #{simple_dnn_forward.1} parent=1 // pred_check
      _
    $region11: #{simple_dnn_forward.1} parent=1 // pred_check_branch
      %27 = sbr.rel (0) target = $region13
    $region12: #{simple_dnn_forward.1} parent=1 // pred_region
      _
    $region13: #{simple_dnn_forward.1} parent=1 // pred_fallthru
      _
    // Predicated region
    $region14: #{simple_dnn_forward.1} parent=1 // pred_check
      _
    $region15: #{simple_dnn_forward.1} parent=1 // pred_check_branch
      %29 = sbr.rel (0) target = $region17
    $region16: #{simple_dnn_forward.1} parent=1 // pred_region
      %s31 = ssub.s32 4096, 4096
      %32 = vsyncadd [#allocation5], %s31
      %s33 = sshll.u32 [#allocation4], 4
      %s34 = int_to_ptr.vmem [resolvable:$true] %s33
      %39 = dma.hbm_to_vmem [thread:$0]  %s3, 4096, %s34, [#allocation5], 64, 64, 4
    $region17: #{simple_dnn_forward.1} parent=1 // pred_fallthru
      _
    // Predicated region
    $region18: #{simple_dnn_forward.1} parent=1 // pred_check
      _
    $region19: #{simple_dnn_forward.1} parent=1 // pred_check_branch
      %41 = sbr.rel (0) target = $region21
    $region20: #{simple_dnn_forward.1} parent=1 // pred_region
      _
    $region21: #{simple_dnn_forward.1} parent=1 // pred_fallthru
      _
    // Predicated region
    $region22: #{simple_dnn_forward.1} parent=1 // pred_check
      _
    $region23: #{simple_dnn_forward.1} parent=1 // pred_check_branch
      %43 = sbr.rel (0) target = $region25
    $region24: #{simple_dnn_forward.1} parent=1 // pred_region
      %44 = dma.done [#allocation3], 25088
    $region25: #{simple_dnn_forward.1} parent=1 // pred_fallthru
      _
    // Predicated region
    $region26: #{simple_dnn_forward.1} parent=1 // pred_check
      _
    $region27: #{simple_dnn_forward.1} parent=1 // pred_check_branch
      %46 = sbr.rel (0) target = $region29
    $region28: #{simple_dnn_forward.1} parent=1 // pred_region
      %47 = dma.done [#allocation5], 4096
    $region29: #{simple_dnn_forward.1} parent=1 // pred_fallthru
      _
    %v49 = vld [vmem:[%s0] sm:$0xff]
    %v50 = vld [vmem:[%s0 + $0x8] sm:$0xff]
    %v51 = vld [vmem:[%s0 + $0x10] sm:$0xff]
    %v52 = vld [vmem:[%s0 + $0x18] sm:$0xff]
    %v53 = vld [vmem:[%s0 + $0x20] sm:$0xff]
    %v54 = vld [vmem:[%s0 + $0x28] sm:$0xff]
    %v55 = vld [vmem:[%s0 + $0x30] sm:$0xff]
    %v56 = vld [vmem:[%s0 + $0x38] sm:$0xff]
    %v57 = vld [vmem:[%s0 + $0x40] sm:$0xff]
    %v58 = vld [vmem:[%s0 + $0x48] sm:$0xff]
    %v59 = vld [vmem:[%s0 + $0x50] sm:$0xff]
    %v60 = vld [vmem:[%s0 + $0x58] sm:$0xff]
    %v61 = vld [vmem:[%s0 + $0x60] sm:$0xff]
    %v62 = vld [vmem:[%s0 + $0x68] sm:$0xff]
    %v63 = vpack.c.bf16 %v56, %v49
    %v64 = vpack.c.bf16 %v57, %v50
    %v65 = vpack.c.bf16 %v58, %v51
    %v66 = vpack.c.bf16 %v59, %v52
    %v67 = vpack.c.bf16 %v60, %v53
    %v68 = vpack.c.bf16 %v61, %v54
    %v69 = vpack.c.bf16 %v62, %v55
    %v70 = vld [vmem:[#allocation2] sm:$0xff]
    %v71 = vld [vmem:[#allocation2 + $0x8] sm:$0xff]
    %v72 = vld [vmem:[#allocation2 + $0x10] sm:$0xff]
    %v73 = vld [vmem:[#allocation2 + $0x18] sm:$0xff]
    %v74 = vld [vmem:[#allocation2 + $0x20] sm:$0xff]
    %v75 = vld [vmem:[#allocation2 + $0x28] sm:$0xff]
    %v76 = vld [vmem:[#allocation2 + $0x30] sm:$0xff]
    %v77 = vld [vmem:[#allocation2 + $0x38] sm:$0xff]
    %v78 = vld [vmem:[#allocation2 + $0x40] sm:$0xff]
    %v79 = vld [vmem:[#allocation2 + $0x48] sm:$0xff]
    %v80 = vld [vmem:[#allocation2 + $0x50] sm:$0xff]
    %v81 = vld [vmem:[#allocation2 + $0x58] sm:$0xff]
    %v82 = vld [vmem:[#allocation2 + $0x60] sm:$0xff]
    %v83 = vld [vmem:[#allocation2 + $0x68] sm:$0xff]
    %v84 = vld [vmem:[#allocation2 + $0x70] sm:$0xff]
    %v85 = vld [vmem:[#allocation2 + $0x78] sm:$0xff]
    %v86 = vld [vmem:[#allocation2 + $0x80] sm:$0xff]
    %v87 = vld [vmem:[#allocation2 + $0x88] sm:$0xff]
    %v88 = vld [vmem:[#allocation2 + $0x90] sm:$0xff]
    %v89 = vld [vmem:[#allocation2 + $0x98] sm:$0xff]
    %v90 = vld [vmem:[#allocation2 + $0xa0] sm:$0xff]
    %v91 = vld [vmem:[#allocation2 + $0xa8] sm:$0xff]
    %v92 = vld [vmem:[#allocation2 + $0xb0] sm:$0xff]
    %v93 = vld [vmem:[#allocation2 + $0xb8] sm:$0xff]
    %v94 = vld [vmem:[#allocation2 + $0xc0] sm:$0xff]
    %v95 = vld [vmem:[#allocation2 + $0xc8] sm:$0xff]
    %v96 = vld [vmem:[#allocation2 + $0xd0] sm:$0xff]
    %v97 = vld [vmem:[#allocation2 + $0xd8] sm:$0xff]
    %v98 = vld [vmem:[#allocation2 + $0xe0] sm:$0xff]
    %v99 = vld [vmem:[#allocation2 + $0xe8] sm:$0xff]
    %v100 = vld [vmem:[#allocation2 + $0xf0] sm:$0xff]
    %v101 = vld [vmem:[#allocation2 + $0xf8] sm:$0xff]
    %v102 = vld [vmem:[#allocation2 + $0x100] sm:$0xff]
    %v103 = vld [vmem:[#allocation2 + $0x108] sm:$0xff]
    %v104 = vld [vmem:[#allocation2 + $0x110] sm:$0xff]
    %v105 = vld [vmem:[#allocation2 + $0x118] sm:$0xff]
    %v106 = vld [vmem:[#allocation2 + $0x120] sm:$0xff]
    %v107 = vld [vmem:[#allocation2 + $0x128] sm:$0xff]
    %v108 = vld [vmem:[#allocation2 + $0x130] sm:$0xff]
    %v109 = vld [vmem:[#allocation2 + $0x138] sm:$0xff]
    %v110 = vld [vmem:[#allocation2 + $0x140] sm:$0xff]
    %v111 = vld [vmem:[#allocation2 + $0x148] sm:$0xff]
    %v112 = vld [vmem:[#allocation2 + $0x150] sm:$0xff]
    %v113 = vld [vmem:[#allocation2 + $0x158] sm:$0xff]
    %v114 = vld [vmem:[#allocation2 + $0x160] sm:$0xff]
    %v115 = vld [vmem:[#allocation2 + $0x168] sm:$0xff]
    %v116 = vld [vmem:[#allocation2 + $0x170] sm:$0xff]
    %v117 = vld [vmem:[#allocation2 + $0x178] sm:$0xff]
    %v118 = vld [vmem:[#allocation2 + $0x180] sm:$0xff]
    %v119 = vld [vmem:[#allocation2 + $0x188] sm:$0xff]
    %v120 = vld [vmem:[#allocation2 + $0x190] sm:$0xff]
    %v121 = vld [vmem:[#allocation2 + $0x198] sm:$0xff]
    %v122 = vld [vmem:[#allocation2 + $0x1a0] sm:$0xff]
    %v123 = vld [vmem:[#allocation2 + $0x1a8] sm:$0xff]
    %v124 = vld [vmem:[#allocation2 + $0x1b0] sm:$0xff]
    %v125 = vld [vmem:[#allocation2 + $0x1b8] sm:$0xff]
    %v126 = vld [vmem:[#allocation2 + $0x1c0] sm:$0xff]
    %v127 = vld [vmem:[#allocation2 + $0x1c8] sm:$0xff]
    %v128 = vld [vmem:[#allocation2 + $0x1d0] sm:$0xff]
    %v129 = vld [vmem:[#allocation2 + $0x1d8] sm:$0xff]
    %v130 = vld [vmem:[#allocation2 + $0x1e0] sm:$0xff]
    %v131 = vld [vmem:[#allocation2 + $0x1e8] sm:$0xff]
    %v132 = vld [vmem:[#allocation2 + $0x1f0] sm:$0xff]
    %v133 = vld [vmem:[#allocation2 + $0x1f8] sm:$0xff]
    %v134 = vld [vmem:[#allocation2 + $0x200] sm:$0xff]
    %v135 = vld [vmem:[#allocation2 + $0x208] sm:$0xff]
    %v136 = vld [vmem:[#allocation2 + $0x210] sm:$0xff]
    %v137 = vld [vmem:[#allocation2 + $0x218] sm:$0xff]
    %v138 = vld [vmem:[#allocation2 + $0x220] sm:$0xff]
    %v139 = vld [vmem:[#allocation2 + $0x228] sm:$0xff]
    %v140 = vld [vmem:[#allocation2 + $0x230] sm:$0xff]
    %v141 = vld [vmem:[#allocation2 + $0x238] sm:$0xff]
    %v142 = vld [vmem:[#allocation2 + $0x240] sm:$0xff]
    %v143 = vld [vmem:[#allocation2 + $0x248] sm:$0xff]
    %v144 = vld [vmem:[#allocation2 + $0x250] sm:$0xff]
    %v145 = vld [vmem:[#allocation2 + $0x258] sm:$0xff]
    %v146 = vld [vmem:[#allocation2 + $0x260] sm:$0xff]
    %v147 = vld [vmem:[#allocation2 + $0x268] sm:$0xff]
    %v148 = vld [vmem:[#allocation2 + $0x270] sm:$0xff]
    %v149 = vld [vmem:[#allocation2 + $0x278] sm:$0xff]
    %v150 = vld [vmem:[#allocation2 + $0x280] sm:$0xff]
    %v151 = vld [vmem:[#allocation2 + $0x288] sm:$0xff]
    %v152 = vld [vmem:[#allocation2 + $0x290] sm:$0xff]
    %v153 = vld [vmem:[#allocation2 + $0x298] sm:$0xff]
    %v154 = vld [vmem:[#allocation2 + $0x2a0] sm:$0xff]
    %v155 = vld [vmem:[#allocation2 + $0x2a8] sm:$0xff]
    %v156 = vld [vmem:[#allocation2 + $0x2b0] sm:$0xff]
    %v157 = vld [vmem:[#allocation2 + $0x2b8] sm:$0xff]
    %v158 = vld [vmem:[#allocation2 + $0x2c0] sm:$0xff]
    %v159 = vld [vmem:[#allocation2 + $0x2c8] sm:$0xff]
    %v160 = vld [vmem:[#allocation2 + $0x2d0] sm:$0xff]
    %v161 = vld [vmem:[#allocation2 + $0x2d8] sm:$0xff]
    %v162 = vld [vmem:[#allocation2 + $0x2e0] sm:$0xff]
    %v163 = vld [vmem:[#allocation2 + $0x2e8] sm:$0xff]
    %v164 = vld [vmem:[#allocation2 + $0x2f0] sm:$0xff]
    %v165 = vld [vmem:[#allocation2 + $0x2f8] sm:$0xff]
    %v166 = vld [vmem:[#allocation2 + $0x300] sm:$0xff]
    %v167 = vld [vmem:[#allocation2 + $0x308] sm:$0xff]
    %v168 = vld [vmem:[#allocation2 + $0x310] sm:$0xff]
    %v169 = vld [vmem:[#allocation2 + $0x318] sm:$0xff]
    %v170 = vld [vmem:[#allocation2 + $0x320] sm:$0xff]
    %v171 = vld [vmem:[#allocation2 + $0x328] sm:$0xff]
    %v172 = vld [vmem:[#allocation2 + $0x330] sm:$0xff]
    %v173 = vld [vmem:[#allocation2 + $0x338] sm:$0xff]
    %v174 = vld [vmem:[#allocation2 + $0x340] sm:$0xff]
    %v175 = vld [vmem:[#allocation2 + $0x348] sm:$0xff]
    %v176 = vld [vmem:[#allocation2 + $0x350] sm:$0xff]
    %v177 = vld [vmem:[#allocation2 + $0x358] sm:$0xff]
    %v178 = vld [vmem:[#allocation2 + $0x360] sm:$0xff]
    %v179 = vld [vmem:[#allocation2 + $0x368] sm:$0xff]
    %v180 = vld [vmem:[#allocation2 + $0x370] sm:$0xff]
    %v181 = vld [vmem:[#allocation2 + $0x378] sm:$0xff]
    %v182 = vld [vmem:[#allocation2 + $0x380] sm:$0xff]
    %v183 = vld [vmem:[#allocation2 + $0x388] sm:$0xff]
    %v184 = vld [vmem:[#allocation2 + $0x390] sm:$0xff]
    %v185 = vld [vmem:[#allocation2 + $0x398] sm:$0xff]
    %v186 = vld [vmem:[#allocation2 + $0x3a0] sm:$0xff]
    %v187 = vld [vmem:[#allocation2 + $0x3a8] sm:$0xff]
    %v188 = vld [vmem:[#allocation2 + $0x3b0] sm:$0xff]
    %v189 = vld [vmem:[#allocation2 + $0x3b8] sm:$0xff]
    %v190 = vld [vmem:[#allocation2 + $0x3c0] sm:$0xff]
    %v191 = vld [vmem:[#allocation2 + $0x3c8] sm:$0xff]
    %v192 = vld [vmem:[#allocation2 + $0x3d0] sm:$0xff]
    %v193 = vld [vmem:[#allocation2 + $0x3d8] sm:$0xff]
    %v194 = vld [vmem:[#allocation2 + $0x3e0] sm:$0xff]
    %v195 = vld [vmem:[#allocation2 + $0x3e8] sm:$0xff]
    %v196 = vld [vmem:[#allocation2 + $0x3f0] sm:$0xff]
    %v197 = vld [vmem:[#allocation2 + $0x3f8] sm:$0xff]
    %v198 = vld [vmem:[#allocation2 + $0x400] sm:$0xff]
    %v199 = vld [vmem:[#allocation2 + $0x408] sm:$0xff]
    %v200 = vld [vmem:[#allocation2 + $0x410] sm:$0xff]
    %v201 = vld [vmem:[#allocation2 + $0x418] sm:$0xff]
    %v202 = vld [vmem:[#allocation2 + $0x420] sm:$0xff]
    %v203 = vld [vmem:[#allocation2 + $0x428] sm:$0xff]
    %v204 = vld [vmem:[#allocation2 + $0x430] sm:$0xff]
    %v205 = vld [vmem:[#allocation2 + $0x438] sm:$0xff]
    %v206 = vld [vmem:[#allocation2 + $0x440] sm:$0xff]
    %v207 = vld [vmem:[#allocation2 + $0x448] sm:$0xff]
    %v208 = vld [vmem:[#allocation2 + $0x450] sm:$0xff]
    %v209 = vld [vmem:[#allocation2 + $0x458] sm:$0xff]
    %v210 = vld [vmem:[#allocation2 + $0x460] sm:$0xff]
    %v211 = vld [vmem:[#allocation2 + $0x468] sm:$0xff]
    %v212 = vld [vmem:[#allocation2 + $0x470] sm:$0xff]
    %v213 = vld [vmem:[#allocation2 + $0x478] sm:$0xff]
    %v214 = vld [vmem:[#allocation2 + $0x480] sm:$0xff]
    %v215 = vld [vmem:[#allocation2 + $0x488] sm:$0xff]
    %v216 = vld [vmem:[#allocation2 + $0x490] sm:$0xff]
    %v217 = vld [vmem:[#allocation2 + $0x498] sm:$0xff]
    %v218 = vld [vmem:[#allocation2 + $0x4a0] sm:$0xff]
    %v219 = vld [vmem:[#allocation2 + $0x4a8] sm:$0xff]
    %v220 = vld [vmem:[#allocation2 + $0x4b0] sm:$0xff]
    %v221 = vld [vmem:[#allocation2 + $0x4b8] sm:$0xff]
    %v222 = vld [vmem:[#allocation2 + $0x4c0] sm:$0xff]
    %v223 = vld [vmem:[#allocation2 + $0x4c8] sm:$0xff]
    %v224 = vld [vmem:[#allocation2 + $0x4d0] sm:$0xff]
    %v225 = vld [vmem:[#allocation2 + $0x4d8] sm:$0xff]
    %v226 = vld [vmem:[#allocation2 + $0x4e0] sm:$0xff]
    %v227 = vld [vmem:[#allocation2 + $0x4e8] sm:$0xff]
    %v228 = vld [vmem:[#allocation2 + $0x4f0] sm:$0xff]
    %v229 = vld [vmem:[#allocation2 + $0x4f8] sm:$0xff]
    %v230 = vld [vmem:[#allocation2 + $0x500] sm:$0xff]
    %v231 = vld [vmem:[#allocation2 + $0x508] sm:$0xff]
    %v232 = vld [vmem:[#allocation2 + $0x510] sm:$0xff]
    %v233 = vld [vmem:[#allocation2 + $0x518] sm:$0xff]
    %v234 = vld [vmem:[#allocation2 + $0x520] sm:$0xff]
    %v235 = vld [vmem:[#allocation2 + $0x528] sm:$0xff]
    %v236 = vld [vmem:[#allocation2 + $0x530] sm:$0xff]
    %v237 = vld [vmem:[#allocation2 + $0x538] sm:$0xff]
    %v238 = vld [vmem:[#allocation2 + $0x540] sm:$0xff]
    %v239 = vld [vmem:[#allocation2 + $0x548] sm:$0xff]
    %v240 = vld [vmem:[#allocation2 + $0x550] sm:$0xff]
    %v241 = vld [vmem:[#allocation2 + $0x558] sm:$0xff]
    %v242 = vld [vmem:[#allocation2 + $0x560] sm:$0xff]
    %v243 = vld [vmem:[#allocation2 + $0x568] sm:$0xff]
    %v244 = vld [vmem:[#allocation2 + $0x570] sm:$0xff]
    %v245 = vld [vmem:[#allocation2 + $0x578] sm:$0xff]
    %v246 = vld [vmem:[#allocation2 + $0x580] sm:$0xff]
    %v247 = vld [vmem:[#allocation2 + $0x588] sm:$0xff]
    %v248 = vld [vmem:[#allocation2 + $0x590] sm:$0xff]
    %v249 = vld [vmem:[#allocation2 + $0x598] sm:$0xff]
    %v250 = vld [vmem:[#allocation2 + $0x5a0] sm:$0xff]
    %v251 = vld [vmem:[#allocation2 + $0x5a8] sm:$0xff]
    %v252 = vld [vmem:[#allocation2 + $0x5b0] sm:$0xff]
    %v253 = vld [vmem:[#allocation2 + $0x5b8] sm:$0xff]
    %v254 = vld [vmem:[#allocation2 + $0x5c0] sm:$0xff]
    %v255 = vld [vmem:[#allocation2 + $0x5c8] sm:$0xff]
    %v256 = vld [vmem:[#allocation2 + $0x5d0] sm:$0xff]
    %v257 = vld [vmem:[#allocation2 + $0x5d8] sm:$0xff]
    %v258 = vld [vmem:[#allocation2 + $0x5e0] sm:$0xff]
    %v259 = vld [vmem:[#allocation2 + $0x5e8] sm:$0xff]
    %v260 = vld [vmem:[#allocation2 + $0x5f0] sm:$0xff]
    %v261 = vld [vmem:[#allocation2 + $0x5f8] sm:$0xff]
    %v262 = vld [vmem:[#allocation2 + $0x600] sm:$0xff]
    %v263 = vld [vmem:[#allocation2 + $0x608] sm:$0xff]
    %v264 = vld [vmem:[#allocation2 + $0x610] sm:$0xff]
    %v265 = vld [vmem:[#allocation2 + $0x618] sm:$0xff]
    %v266 = vld [vmem:[%s2] sm:$0xf]
    %v268 = vlaneseq
    %v269 = vshrl.u32 %v268, 7
    %v270 = vsub.s32 0, %v269
    %v271 = vrot.slane %v266, %v270
    %v272 = vlaneseq
    %v273 = vshrl.u32 %v272, 7
    %v274 = vsub.s32 1, %v273
    %v275 = vrot.slane %v266, %v274
    %v276 = vlaneseq
    %v277 = vshrl.u32 %v276, 7
    %v278 = vsub.s32 2, %v277
    %v279 = vrot.slane %v266, %v278
    %v280 = vlaneseq
    %v281 = vshrl.u32 %v280, 7
    %v282 = vsub.s32 3, %v281
    %v283 = vrot.slane %v266, %v282
    %v484 = vunpack.c.l.b16 %v70
    %v485 = vunpack.c.h.b16 %v70
    %v486 = vunpack.c.l.b16 %v71
    %v487 = vunpack.c.h.b16 %v71
    %v488 = vunpack.c.l.b16 %v72
    %v489 = vunpack.c.h.b16 %v72
    %v490 = vunpack.c.l.b16 %v73
    %v491 = vunpack.c.h.b16 %v73
    %v492 = vunpack.c.l.b16 %v74
    %v493 = vunpack.c.h.b16 %v74
    %v494 = vunpack.c.l.b16 %v75
    %v495 = vunpack.c.h.b16 %v75
    %v496 = vunpack.c.l.b16 %v76
    %v497 = vunpack.c.h.b16 %v76
    %v498 = vunpack.c.l.b16 %v77
    %v499 = vunpack.c.h.b16 %v77
    %v500 = vunpack.c.l.b16 %v78
    %v501 = vunpack.c.h.b16 %v78
    %v502 = vunpack.c.l.b16 %v79
    %v503 = vunpack.c.h.b16 %v79
    %v504 = vunpack.c.l.b16 %v80
    %v505 = vunpack.c.h.b16 %v80
    %v506 = vunpack.c.l.b16 %v81
    %v507 = vunpack.c.h.b16 %v81
    %v508 = vunpack.c.l.b16 %v82
    %v509 = vunpack.c.h.b16 %v82
    %v510 = vunpack.c.l.b16 %v83
    %v511 = vunpack.c.h.b16 %v83
    %v512 = vunpack.c.l.b16 %v84
    %v513 = vunpack.c.h.b16 %v84
    %v514 = vunpack.c.l.b16 %v85
    %v515 = vunpack.c.h.b16 %v85
    %v516 = vunpack.c.l.b16 %v86
    %v517 = vunpack.c.h.b16 %v86
    %v518 = vunpack.c.l.b16 %v87
    %v519 = vunpack.c.h.b16 %v87
    %v520 = vunpack.c.l.b16 %v88
    %v521 = vunpack.c.h.b16 %v88
    %v522 = vunpack.c.l.b16 %v89
    %v523 = vunpack.c.h.b16 %v89
    %v524 = vunpack.c.l.b16 %v90
    %v525 = vunpack.c.h.b16 %v90
    %v526 = vunpack.c.l.b16 %v91
    %v527 = vunpack.c.h.b16 %v91
    %v528 = vunpack.c.l.b16 %v92
    %v529 = vunpack.c.h.b16 %v92
    %v530 = vunpack.c.l.b16 %v93
    %v531 = vunpack.c.h.b16 %v93
    %v532 = vunpack.c.l.b16 %v94
    %v533 = vunpack.c.h.b16 %v94
    %v534 = vunpack.c.l.b16 %v95
    %v535 = vunpack.c.h.b16 %v95
    %v536 = vunpack.c.l.b16 %v96
    %v537 = vunpack.c.h.b16 %v96
    %v538 = vunpack.c.l.b16 %v97
    %v539 = vunpack.c.h.b16 %v97
    %v540 = vunpack.c.l.b16 %v98
    %v541 = vunpack.c.h.b16 %v98
    %v542 = vunpack.c.l.b16 %v99
    %v543 = vunpack.c.h.b16 %v99
    %v544 = vunpack.c.l.b16 %v100
    %v545 = vunpack.c.h.b16 %v100
    %v546 = vunpack.c.l.b16 %v101
    %v547 = vunpack.c.h.b16 %v101
    %v548 = vunpack.c.l.b16 %v102
    %v549 = vunpack.c.h.b16 %v102
    %v550 = vunpack.c.l.b16 %v103
    %v551 = vunpack.c.h.b16 %v103
    %v552 = vunpack.c.l.b16 %v104
    %v553 = vunpack.c.h.b16 %v104
    %v554 = vunpack.c.l.b16 %v105
    %v555 = vunpack.c.h.b16 %v105
    %v556 = vunpack.c.l.b16 %v106
    %v557 = vunpack.c.h.b16 %v106
    %v558 = vunpack.c.l.b16 %v107
    %v559 = vunpack.c.h.b16 %v107
    %v560 = vunpack.c.l.b16 %v108
    %v561 = vunpack.c.h.b16 %v108
    %v562 = vunpack.c.l.b16 %v109
    %v563 = vunpack.c.h.b16 %v109
    %v564 = vunpack.c.l.b16 %v110
    %v565 = vunpack.c.h.b16 %v110
    %v566 = vunpack.c.l.b16 %v111
    %v567 = vunpack.c.h.b16 %v111
    %v568 = vunpack.c.l.b16 %v112
    %v569 = vunpack.c.h.b16 %v112
    %v570 = vunpack.c.l.b16 %v113
    %v571 = vunpack.c.h.b16 %v113
    %v572 = vunpack.c.l.b16 %v114
    %v573 = vunpack.c.h.b16 %v114
    %v574 = vunpack.c.l.b16 %v115
    %v575 = vunpack.c.h.b16 %v115
    %v576 = vunpack.c.l.b16 %v116
    %v577 = vunpack.c.h.b16 %v116
    %v578 = vunpack.c.l.b16 %v117
    %v579 = vunpack.c.h.b16 %v117
    %v580 = vunpack.c.l.b16 %v118
    %v581 = vunpack.c.h.b16 %v118
    %v582 = vunpack.c.l.b16 %v119
    %v583 = vunpack.c.h.b16 %v119
    %v584 = vunpack.c.l.b16 %v120
    %v585 = vunpack.c.h.b16 %v120
    %v586 = vunpack.c.l.b16 %v121
    %v587 = vunpack.c.h.b16 %v121
    %v588 = vunpack.c.l.b16 %v122
    %v589 = vunpack.c.h.b16 %v122
    %v590 = vunpack.c.l.b16 %v123
    %v591 = vunpack.c.h.b16 %v123
    %v592 = vunpack.c.l.b16 %v124
    %v593 = vunpack.c.h.b16 %v124
    %v594 = vunpack.c.l.b16 %v125
    %v595 = vunpack.c.h.b16 %v125
    %v596 = vunpack.c.l.b16 %v126
    %v597 = vunpack.c.h.b16 %v126
    %v598 = vunpack.c.l.b16 %v127
    %v599 = vunpack.c.h.b16 %v127
    %v600 = vunpack.c.l.b16 %v128
    %v601 = vunpack.c.h.b16 %v128
    %v602 = vunpack.c.l.b16 %v129
    %v603 = vunpack.c.h.b16 %v129
    %v604 = vunpack.c.l.b16 %v130
    %v605 = vunpack.c.h.b16 %v130
    %v606 = vunpack.c.l.b16 %v131
    %v607 = vunpack.c.h.b16 %v131
    %v608 = vunpack.c.l.b16 %v132
    %v609 = vunpack.c.h.b16 %v132
    %v610 = vunpack.c.l.b16 %v133
    %v611 = vunpack.c.h.b16 %v133
    %v612 = vunpack.c.l.b16 %v134
    %v613 = vunpack.c.h.b16 %v134
    %v614 = vunpack.c.l.b16 %v135
    %v615 = vunpack.c.h.b16 %v135
    %v616 = vunpack.c.l.b16 %v136
    %v617 = vunpack.c.h.b16 %v136
    %v618 = vunpack.c.l.b16 %v137
    %v619 = vunpack.c.h.b16 %v137
    %v620 = vunpack.c.l.b16 %v138
    %v621 = vunpack.c.h.b16 %v138
    %v622 = vunpack.c.l.b16 %v139
    %v623 = vunpack.c.h.b16 %v139
    %v624 = vunpack.c.l.b16 %v140
    %v625 = vunpack.c.h.b16 %v140
    %v626 = vunpack.c.l.b16 %v141
    %v627 = vunpack.c.h.b16 %v141
    %v628 = vunpack.c.l.b16 %v142
    %v629 = vunpack.c.h.b16 %v142
    %v630 = vunpack.c.l.b16 %v143
    %v631 = vunpack.c.h.b16 %v143
    %v632 = vunpack.c.l.b16 %v144
    %v633 = vunpack.c.h.b16 %v144
    %v634 = vunpack.c.l.b16 %v145
    %v635 = vunpack.c.h.b16 %v145
    %v636 = vunpack.c.l.b16 %v146
    %v637 = vunpack.c.h.b16 %v146
    %v638 = vunpack.c.l.b16 %v147
    %v639 = vunpack.c.h.b16 %v147
    %v640 = vunpack.c.l.b16 %v148
    %v641 = vunpack.c.h.b16 %v148
    %v642 = vunpack.c.l.b16 %v149
    %v643 = vunpack.c.h.b16 %v149
    %v644 = vunpack.c.l.b16 %v150
    %v645 = vunpack.c.h.b16 %v150
    %v646 = vunpack.c.l.b16 %v151
    %v647 = vunpack.c.h.b16 %v151
    %v648 = vunpack.c.l.b16 %v152
    %v649 = vunpack.c.h.b16 %v152
    %v650 = vunpack.c.l.b16 %v153
    %v651 = vunpack.c.h.b16 %v153
    %v652 = vunpack.c.l.b16 %v154
    %v653 = vunpack.c.h.b16 %v154
    %v654 = vunpack.c.l.b16 %v155
    %v655 = vunpack.c.h.b16 %v155
    %v656 = vunpack.c.l.b16 %v156
    %v657 = vunpack.c.h.b16 %v156
    %v658 = vunpack.c.l.b16 %v157
    %v659 = vunpack.c.h.b16 %v157
    %v660 = vunpack.c.l.b16 %v158
    %v661 = vunpack.c.h.b16 %v158
    %v662 = vunpack.c.l.b16 %v159
    %v663 = vunpack.c.h.b16 %v159
    %v664 = vunpack.c.l.b16 %v160
    %v665 = vunpack.c.h.b16 %v160
    %v666 = vunpack.c.l.b16 %v161
    %v667 = vunpack.c.h.b16 %v161
    %v668 = vunpack.c.l.b16 %v162
    %v669 = vunpack.c.h.b16 %v162
    %v670 = vunpack.c.l.b16 %v163
    %v671 = vunpack.c.h.b16 %v163
    %v672 = vunpack.c.l.b16 %v164
    %v673 = vunpack.c.h.b16 %v164
    %v674 = vunpack.c.l.b16 %v165
    %v675 = vunpack.c.h.b16 %v165
    %v676 = vunpack.c.l.b16 %v166
    %v677 = vunpack.c.h.b16 %v166
    %v678 = vunpack.c.l.b16 %v167
    %v679 = vunpack.c.h.b16 %v167
    %v680 = vunpack.c.l.b16 %v168
    %v681 = vunpack.c.h.b16 %v168
    %v682 = vunpack.c.l.b16 %v169
    %v683 = vunpack.c.h.b16 %v169
    %v684 = vunpack.c.l.b16 %v170
    %v685 = vunpack.c.h.b16 %v170
    %v686 = vunpack.c.l.b16 %v171
    %v687 = vunpack.c.h.b16 %v171
    %v688 = vunpack.c.l.b16 %v172
    %v689 = vunpack.c.h.b16 %v172
    %v690 = vunpack.c.l.b16 %v173
    %v691 = vunpack.c.h.b16 %v173
    %v692 = vunpack.c.l.b16 %v174
    %v693 = vunpack.c.h.b16 %v174
    %v694 = vunpack.c.l.b16 %v175
    %v695 = vunpack.c.h.b16 %v175
    %v696 = vunpack.c.l.b16 %v176
    %v697 = vunpack.c.h.b16 %v176
    %v698 = vunpack.c.l.b16 %v177
    %v699 = vunpack.c.h.b16 %v177
    %v700 = vunpack.c.l.b16 %v178
    %v701 = vunpack.c.h.b16 %v178
    %v702 = vunpack.c.l.b16 %v179
    %v703 = vunpack.c.h.b16 %v179
    %v704 = vunpack.c.l.b16 %v180
    %v705 = vunpack.c.h.b16 %v180
    %v706 = vunpack.c.l.b16 %v181
    %v707 = vunpack.c.h.b16 %v181
    %v708 = vunpack.c.l.b16 %v182
    %v709 = vunpack.c.h.b16 %v182
    %v710 = vunpack.c.l.b16 %v183
    %v711 = vunpack.c.h.b16 %v183
    %v712 = vunpack.c.l.b16 %v184
    %v713 = vunpack.c.h.b16 %v184
    %v714 = vunpack.c.l.b16 %v185
    %v715 = vunpack.c.h.b16 %v185
    %v716 = vunpack.c.l.b16 %v186
    %v717 = vunpack.c.h.b16 %v186
    %v718 = vunpack.c.l.b16 %v187
    %v719 = vunpack.c.h.b16 %v187
    %v720 = vunpack.c.l.b16 %v188
    %v721 = vunpack.c.h.b16 %v188
    %v722 = vunpack.c.l.b16 %v189
    %v723 = vunpack.c.h.b16 %v189
    %v724 = vunpack.c.l.b16 %v190
    %v725 = vunpack.c.h.b16 %v190
    %v726 = vunpack.c.l.b16 %v191
    %v727 = vunpack.c.h.b16 %v191
    %v728 = vunpack.c.l.b16 %v192
    %v729 = vunpack.c.h.b16 %v192
    %v730 = vunpack.c.l.b16 %v193
    %v731 = vunpack.c.h.b16 %v193
    %v732 = vunpack.c.l.b16 %v194
    %v733 = vunpack.c.h.b16 %v194
    %v734 = vunpack.c.l.b16 %v195
    %v735 = vunpack.c.h.b16 %v195
    %v736 = vunpack.c.l.b16 %v196
    %v737 = vunpack.c.h.b16 %v196
    %v738 = vunpack.c.l.b16 %v197
    %v739 = vunpack.c.h.b16 %v197
    %v740 = vunpack.c.l.b16 %v198
    %v741 = vunpack.c.h.b16 %v198
    %v742 = vunpack.c.l.b16 %v199
    %v743 = vunpack.c.h.b16 %v199
    %v744 = vunpack.c.l.b16 %v200
    %v745 = vunpack.c.h.b16 %v200
    %v746 = vunpack.c.l.b16 %v201
    %v747 = vunpack.c.h.b16 %v201
    %v748 = vunpack.c.l.b16 %v202
    %v749 = vunpack.c.h.b16 %v202
    %v750 = vunpack.c.l.b16 %v203
    %v751 = vunpack.c.h.b16 %v203
    %v752 = vunpack.c.l.b16 %v204
    %v753 = vunpack.c.h.b16 %v204
    %v754 = vunpack.c.l.b16 %v205
    %v755 = vunpack.c.h.b16 %v205
    %v756 = vunpack.c.l.b16 %v206
    %v757 = vunpack.c.h.b16 %v206
    %v758 = vunpack.c.l.b16 %v207
    %v759 = vunpack.c.h.b16 %v207
    %v760 = vunpack.c.l.b16 %v208
    %v761 = vunpack.c.h.b16 %v208
    %v762 = vunpack.c.l.b16 %v209
    %v763 = vunpack.c.h.b16 %v209
    %v764 = vunpack.c.l.b16 %v210
    %v765 = vunpack.c.h.b16 %v210
    %v766 = vunpack.c.l.b16 %v211
    %v767 = vunpack.c.h.b16 %v211
    %v768 = vunpack.c.l.b16 %v212
    %v769 = vunpack.c.h.b16 %v212
    %v770 = vunpack.c.l.b16 %v213
    %v771 = vunpack.c.h.b16 %v213
    %v772 = vunpack.c.l.b16 %v214
    %v773 = vunpack.c.h.b16 %v214
    %v774 = vunpack.c.l.b16 %v215
    %v775 = vunpack.c.h.b16 %v215
    %v776 = vunpack.c.l.b16 %v216
    %v777 = vunpack.c.h.b16 %v216
    %v778 = vunpack.c.l.b16 %v217
    %v779 = vunpack.c.h.b16 %v217
    %v780 = vunpack.c.l.b16 %v218
    %v781 = vunpack.c.h.b16 %v218
    %v782 = vunpack.c.l.b16 %v219
    %v783 = vunpack.c.h.b16 %v219
    %v784 = vunpack.c.l.b16 %v220
    %v785 = vunpack.c.h.b16 %v220
    %v786 = vunpack.c.l.b16 %v221
    %v787 = vunpack.c.h.b16 %v221
    %v788 = vunpack.c.l.b16 %v222
    %v789 = vunpack.c.h.b16 %v222
    %v790 = vunpack.c.l.b16 %v223
    %v791 = vunpack.c.h.b16 %v223
    %v792 = vunpack.c.l.b16 %v224
    %v793 = vunpack.c.h.b16 %v224
    %v794 = vunpack.c.l.b16 %v225
    %v795 = vunpack.c.h.b16 %v225
    %v796 = vunpack.c.l.b16 %v226
    %v797 = vunpack.c.h.b16 %v226
    %v798 = vunpack.c.l.b16 %v227
    %v799 = vunpack.c.h.b16 %v227
    %v800 = vunpack.c.l.b16 %v228
    %v801 = vunpack.c.h.b16 %v228
    %v802 = vunpack.c.l.b16 %v229
    %v803 = vunpack.c.h.b16 %v229
    %v804 = vunpack.c.l.b16 %v230
    %v805 = vunpack.c.h.b16 %v230
    %v806 = vunpack.c.l.b16 %v231
    %v807 = vunpack.c.h.b16 %v231
    %v808 = vunpack.c.l.b16 %v232
    %v809 = vunpack.c.h.b16 %v232
    %v810 = vunpack.c.l.b16 %v233
    %v811 = vunpack.c.h.b16 %v233
    %v812 = vunpack.c.l.b16 %v234
    %v813 = vunpack.c.h.b16 %v234
    %v814 = vunpack.c.l.b16 %v235
    %v815 = vunpack.c.h.b16 %v235
    %v816 = vunpack.c.l.b16 %v236
    %v817 = vunpack.c.h.b16 %v236
    %v818 = vunpack.c.l.b16 %v237
    %v819 = vunpack.c.h.b16 %v237
    %v820 = vunpack.c.l.b16 %v238
    %v821 = vunpack.c.h.b16 %v238
    %v822 = vunpack.c.l.b16 %v239
    %v823 = vunpack.c.h.b16 %v239
    %v824 = vunpack.c.l.b16 %v240
    %v825 = vunpack.c.h.b16 %v240
    %v826 = vunpack.c.l.b16 %v241
    %v827 = vunpack.c.h.b16 %v241
    %v828 = vunpack.c.l.b16 %v242
    %v829 = vunpack.c.h.b16 %v242
    %v830 = vunpack.c.l.b16 %v243
    %v831 = vunpack.c.h.b16 %v243
    %v832 = vunpack.c.l.b16 %v244
    %v833 = vunpack.c.h.b16 %v244
    %v834 = vunpack.c.l.b16 %v245
    %v835 = vunpack.c.h.b16 %v245
    %v836 = vunpack.c.l.b16 %v246
    %v837 = vunpack.c.h.b16 %v246
    %v838 = vunpack.c.l.b16 %v247
    %v839 = vunpack.c.h.b16 %v247
    %v840 = vunpack.c.l.b16 %v248
    %v841 = vunpack.c.h.b16 %v248
    %v842 = vunpack.c.l.b16 %v249
    %v843 = vunpack.c.h.b16 %v249
    %v844 = vunpack.c.l.b16 %v250
    %v845 = vunpack.c.h.b16 %v250
    %v846 = vunpack.c.l.b16 %v251
    %v847 = vunpack.c.h.b16 %v251
    %v848 = vunpack.c.l.b16 %v252
    %v849 = vunpack.c.h.b16 %v252
    %v850 = vunpack.c.l.b16 %v253
    %v851 = vunpack.c.h.b16 %v253
    %v852 = vunpack.c.l.b16 %v254
    %v853 = vunpack.c.h.b16 %v254
    %v854 = vunpack.c.l.b16 %v255
    %v855 = vunpack.c.h.b16 %v255
    %v856 = vunpack.c.l.b16 %v256
    %v857 = vunpack.c.h.b16 %v256
    %v858 = vunpack.c.l.b16 %v257
    %v859 = vunpack.c.h.b16 %v257
    %v860 = vunpack.c.l.b16 %v258
    %v861 = vunpack.c.h.b16 %v258
    %v862 = vunpack.c.l.b16 %v259
    %v863 = vunpack.c.h.b16 %v259
    %v864 = vunpack.c.l.b16 %v260
    %v865 = vunpack.c.h.b16 %v260
    %v866 = vunpack.c.l.b16 %v261
    %v867 = vunpack.c.h.b16 %v261
    %v868 = vunpack.c.l.b16 %v262
    %v869 = vunpack.c.h.b16 %v262
    %v870 = vunpack.c.l.b16 %v263
    %v871 = vunpack.c.h.b16 %v263
    %v872 = vunpack.c.l.b16 %v264
    %v873 = vunpack.c.h.b16 %v264
    %v874 = vunpack.c.l.b16 %v265
    %v875 = vunpack.c.h.b16 %v265
    %v876 = vpack.c.b16 %v488, %v484
    %v877 = vpack.c.b16 %v489, %v485
    %v878 = vpack.c.b16 %v490, %v486
    %v879 = vpack.c.b16 %v491, %v487
    %v880 = vpack.c.b16 %v496, %v492
    %v881 = vpack.c.b16 %v497, %v493
    %v882 = vpack.c.b16 %v498, %v494
    %v883 = vpack.c.b16 %v499, %v495
    %v884 = vpack.c.b16 %v504, %v500
    %v885 = vpack.c.b16 %v505, %v501
    %v886 = vpack.c.b16 %v506, %v502
    %v887 = vpack.c.b16 %v507, %v503
    %v888 = vpack.c.b16 %v512, %v508
    %v889 = vpack.c.b16 %v513, %v509
    %v890 = vpack.c.b16 %v514, %v510
    %v891 = vpack.c.b16 %v515, %v511
    %v892 = vpack.c.b16 %v520, %v516
    %v893 = vpack.c.b16 %v521, %v517
    %v894 = vpack.c.b16 %v522, %v518
    %v895 = vpack.c.b16 %v523, %v519
    %v896 = vpack.c.b16 %v528, %v524
    %v897 = vpack.c.b16 %v529, %v525
    %v898 = vpack.c.b16 %v530, %v526
    %v899 = vpack.c.b16 %v531, %v527
    %v900 = vpack.c.b16 %v536, %v532
    %v901 = vpack.c.b16 %v537, %v533
    %v902 = vpack.c.b16 %v538, %v534
    %v903 = vpack.c.b16 %v539, %v535
    %v904 = vpack.c.b16 %v544, %v540
    %v905 = vpack.c.b16 %v545, %v541
    %v906 = vpack.c.b16 %v546, %v542
    %v907 = vpack.c.b16 %v547, %v543
    %v908 = vpack.c.b16 %v552, %v548
    %v909 = vpack.c.b16 %v553, %v549
    %v910 = vpack.c.b16 %v554, %v550
    %v911 = vpack.c.b16 %v555, %v551
    %v912 = vpack.c.b16 %v560, %v556
    %v913 = vpack.c.b16 %v561, %v557
    %v914 = vpack.c.b16 %v562, %v558
    %v915 = vpack.c.b16 %v563, %v559
    %v916 = vpack.c.b16 %v568, %v564
    %v917 = vpack.c.b16 %v569, %v565
    %v918 = vpack.c.b16 %v570, %v566
    %v919 = vpack.c.b16 %v571, %v567
    %v920 = vpack.c.b16 %v576, %v572
    %v921 = vpack.c.b16 %v577, %v573
    %v922 = vpack.c.b16 %v578, %v574
    %v923 = vpack.c.b16 %v579, %v575
    %v924 = vpack.c.b16 %v584, %v580
    %v925 = vpack.c.b16 %v585, %v581
    %v926 = vpack.c.b16 %v586, %v582
    %v927 = vpack.c.b16 %v587, %v583
    %v928 = vpack.c.b16 %v592, %v588
    %v929 = vpack.c.b16 %v593, %v589
    %v930 = vpack.c.b16 %v594, %v590
    %v931 = vpack.c.b16 %v595, %v591
    %v932 = vpack.c.b16 %v600, %v596
    %v933 = vpack.c.b16 %v601, %v597
    %v934 = vpack.c.b16 %v602, %v598
    %v935 = vpack.c.b16 %v603, %v599
    %v936 = vpack.c.b16 %v608, %v604
    %v937 = vpack.c.b16 %v609, %v605
    %v938 = vpack.c.b16 %v610, %v606
    %v939 = vpack.c.b16 %v611, %v607
    %v940 = vpack.c.b16 %v616, %v612
    %v941 = vpack.c.b16 %v617, %v613
    %v942 = vpack.c.b16 %v618, %v614
    %v943 = vpack.c.b16 %v619, %v615
    %v944 = vpack.c.b16 %v624, %v620
    %v945 = vpack.c.b16 %v625, %v621
    %v946 = vpack.c.b16 %v626, %v622
    %v947 = vpack.c.b16 %v627, %v623
    %v948 = vpack.c.b16 %v632, %v628
    %v949 = vpack.c.b16 %v633, %v629
    %v950 = vpack.c.b16 %v634, %v630
    %v951 = vpack.c.b16 %v635, %v631
    %v952 = vpack.c.b16 %v640, %v636
    %v953 = vpack.c.b16 %v641, %v637
    %v954 = vpack.c.b16 %v642, %v638
    %v955 = vpack.c.b16 %v643, %v639
    %v956 = vpack.c.b16 %v648, %v644
    %v957 = vpack.c.b16 %v649, %v645
    %v958 = vpack.c.b16 %v650, %v646
    %v959 = vpack.c.b16 %v651, %v647
    %v960 = vpack.c.b16 %v656, %v652
    %v961 = vpack.c.b16 %v657, %v653
    %v962 = vpack.c.b16 %v658, %v654
    %v963 = vpack.c.b16 %v659, %v655
    %v964 = vpack.c.b16 %v664, %v660
    %v965 = vpack.c.b16 %v665, %v661
    %v966 = vpack.c.b16 %v666, %v662
    %v967 = vpack.c.b16 %v667, %v663
    %v968 = vpack.c.b16 %v672, %v668
    %v969 = vpack.c.b16 %v673, %v669
    %v970 = vpack.c.b16 %v674, %v670
    %v971 = vpack.c.b16 %v675, %v671
    %v972 = vpack.c.b16 %v680, %v676
    %v973 = vpack.c.b16 %v681, %v677
    %v974 = vpack.c.b16 %v682, %v678
    %v975 = vpack.c.b16 %v683, %v679
    %v976 = vpack.c.b16 %v688, %v684
    %v977 = vpack.c.b16 %v689, %v685
    %v978 = vpack.c.b16 %v690, %v686
    %v979 = vpack.c.b16 %v691, %v687
    %v980 = vpack.c.b16 %v696, %v692
    %v981 = vpack.c.b16 %v697, %v693
    %v982 = vpack.c.b16 %v698, %v694
    %v983 = vpack.c.b16 %v699, %v695
    %v984 = vpack.c.b16 %v704, %v700
    %v985 = vpack.c.b16 %v705, %v701
    %v986 = vpack.c.b16 %v706, %v702
    %v987 = vpack.c.b16 %v707, %v703
    %v988 = vpack.c.b16 %v712, %v708
    %v989 = vpack.c.b16 %v713, %v709
    %v990 = vpack.c.b16 %v714, %v710
    %v991 = vpack.c.b16 %v715, %v711
    %v992 = vpack.c.b16 %v720, %v716
    %v993 = vpack.c.b16 %v721, %v717
    %v994 = vpack.c.b16 %v722, %v718
    %v995 = vpack.c.b16 %v723, %v719
    %v996 = vpack.c.b16 %v728, %v724
    %v997 = vpack.c.b16 %v729, %v725
    %v998 = vpack.c.b16 %v730, %v726
    %v999 = vpack.c.b16 %v731, %v727
    %v1000 = vpack.c.b16 %v736, %v732
    %v1001 = vpack.c.b16 %v737, %v733
    %v1002 = vpack.c.b16 %v738, %v734
    %v1003 = vpack.c.b16 %v739, %v735
    %v1004 = vpack.c.b16 %v744, %v740
    %v1005 = vpack.c.b16 %v745, %v741
    %v1006 = vpack.c.b16 %v746, %v742
    %v1007 = vpack.c.b16 %v747, %v743
    %v1008 = vpack.c.b16 %v752, %v748
    %v1009 = vpack.c.b16 %v753, %v749
    %v1010 = vpack.c.b16 %v754, %v750
    %v1011 = vpack.c.b16 %v755, %v751
    %v1012 = vpack.c.b16 %v760, %v756
    %v1013 = vpack.c.b16 %v761, %v757
    %v1014 = vpack.c.b16 %v762, %v758
    %v1015 = vpack.c.b16 %v763, %v759
    %v1016 = vpack.c.b16 %v768, %v764
    %v1017 = vpack.c.b16 %v769, %v765
    %v1018 = vpack.c.b16 %v770, %v766
    %v1019 = vpack.c.b16 %v771, %v767
    %v1020 = vpack.c.b16 %v776, %v772
    %v1021 = vpack.c.b16 %v777, %v773
    %v1022 = vpack.c.b16 %v778, %v774
    %v1023 = vpack.c.b16 %v779, %v775
    %v1024 = vpack.c.b16 %v784, %v780
    %v1025 = vpack.c.b16 %v785, %v781
    %v1026 = vpack.c.b16 %v786, %v782
    %v1027 = vpack.c.b16 %v787, %v783
    %v1028 = vpack.c.b16 %v792, %v788
    %v1029 = vpack.c.b16 %v793, %v789
    %v1030 = vpack.c.b16 %v794, %v790
    %v1031 = vpack.c.b16 %v795, %v791
    %v1032 = vpack.c.b16 %v800, %v796
    %v1033 = vpack.c.b16 %v801, %v797
    %v1034 = vpack.c.b16 %v802, %v798
    %v1035 = vpack.c.b16 %v803, %v799
    %v1036 = vpack.c.b16 %v808, %v804
    %v1037 = vpack.c.b16 %v809, %v805
    %v1038 = vpack.c.b16 %v810, %v806
    %v1039 = vpack.c.b16 %v811, %v807
    %v1040 = vpack.c.b16 %v816, %v812
    %v1041 = vpack.c.b16 %v817, %v813
    %v1042 = vpack.c.b16 %v818, %v814
    %v1043 = vpack.c.b16 %v819, %v815
    %v1044 = vpack.c.b16 %v824, %v820
    %v1045 = vpack.c.b16 %v825, %v821
    %v1046 = vpack.c.b16 %v826, %v822
    %v1047 = vpack.c.b16 %v827, %v823
    %v1048 = vpack.c.b16 %v832, %v828
    %v1049 = vpack.c.b16 %v833, %v829
    %v1050 = vpack.c.b16 %v834, %v830
    %v1051 = vpack.c.b16 %v835, %v831
    %v1052 = vpack.c.b16 %v840, %v836
    %v1053 = vpack.c.b16 %v841, %v837
    %v1054 = vpack.c.b16 %v842, %v838
    %v1055 = vpack.c.b16 %v843, %v839
    %v1056 = vpack.c.b16 %v848, %v844
    %v1057 = vpack.c.b16 %v849, %v845
    %v1058 = vpack.c.b16 %v850, %v846
    %v1059 = vpack.c.b16 %v851, %v847
    %v1060 = vpack.c.b16 %v856, %v852
    %v1061 = vpack.c.b16 %v857, %v853
    %v1062 = vpack.c.b16 %v858, %v854
    %v1063 = vpack.c.b16 %v859, %v855
    %v1064 = vpack.c.b16 %v864, %v860
    %v1065 = vpack.c.b16 %v865, %v861
    %v1066 = vpack.c.b16 %v866, %v862
    %v1067 = vpack.c.b16 %v867, %v863
    %v1068 = vpack.c.b16 %v872, %v868
    %v1069 = vpack.c.b16 %v873, %v869
    %v1070 = vpack.c.b16 %v874, %v870
    %v1071 = vpack.c.b16 %v875, %v871
    %vm1268 = vcmask 130048
    %v1270 = vsel %vm1268, %v69, 0
    %1272 = vmatprep.subr.bf16.mxu0 %v877
    %1273 = vmatpush1.bf16.msra.mxu0 %v876
    %1274 = vmatprep.subr.bf16.mxu0 %v881
    %1275 = vmatpush1.bf16.msra.mxu0 %v880
    %1276 = vmatprep.subr.bf16.mxu0 %v885
    %1277 = vmatpush1.bf16.msra.mxu0 %v884
    %1278 = vmatprep.subr.bf16.mxu0 %v889
    %1279 = vmatpush1.bf16.msra.mxu0 %v888
    %1280 = vmatprep.subr.bf16.mxu0 %v893
    %1281 = vmatpush1.bf16.msra.mxu0 %v892
    %1282 = vmatprep.subr.bf16.mxu0 %v897
    %1283 = vmatpush1.bf16.msra.mxu0 %v896
    %1284 = vmatprep.subr.bf16.mxu0 %v901
    %1285 = vmatpush1.bf16.msra.mxu0 %v900
    %1286 = vmatprep.subr.bf16.mxu0 %v905
    %1287 = vmatpush1.bf16.msra.mxu0 %v904
    %1288 = vmatprep.subr.bf16.mxu0 %v909
    %1289 = vmatpush1.bf16.msra.mxu0 %v908
    %1290 = vmatprep.subr.bf16.mxu0 %v913
    %1291 = vmatpush1.bf16.msra.mxu0 %v912
    %1292 = vmatprep.subr.bf16.mxu0 %v917
    %1293 = vmatpush1.bf16.msra.mxu0 %v916
    %1294 = vmatprep.subr.bf16.mxu0 %v921
    %1295 = vmatpush1.bf16.msra.mxu0 %v920
    %1296 = vmatprep.subr.bf16.mxu0 %v925
    %1297 = vmatpush1.bf16.msra.mxu0 %v924
    %1298 = vmatprep.subr.bf16.mxu0 %v929
    %1299 = vmatpush1.bf16.msra.mxu0 %v928
    %1300 = vmatprep.subr.bf16.mxu0 %v933
    %1301 = vmatpush1.bf16.msra.mxu0 %v932
    %1302 = vmatprep.subr.bf16.mxu0 %v937
    %1303 = vmatpush1.bf16.msra.mxu0 %v936
    %1304 = vmatprep.mubr.bf16.mxu0 %v64
    %1305 = vmatmul.mubr.bf16.gmra.mrb[0].mxu0 %v63
    %v1306 = vpop.f32.mrb[0].mxu0
    %v1307 = vadd.f32 %v271, %v1306
    %v1308 = vpop.f32.mrb[0].mxu0
    %v1309 = vadd.f32 %v275, %v1308
    %v1310 = vpop.f32.mrb[0].mxu0
    %v1311 = vadd.f32 %v271, %v1310
    %v1312 = vpop.f32.mrb[0].mxu0
    %v1313 = vadd.f32 %v275, %v1312
    %1314 = vdwg.mxu0
    %1315 = vmatprep.subr.bf16.mxu0 %v941
    %1316 = vmatpush1.bf16.msra.mxu0 %v940
    %1317 = vmatprep.subr.bf16.mxu0 %v945
    %1318 = vmatpush1.bf16.msra.mxu0 %v944
    %1319 = vmatprep.subr.bf16.mxu0 %v949
    %1320 = vmatpush1.bf16.msra.mxu0 %v948
    %1321 = vmatprep.subr.bf16.mxu0 %v953
    %1322 = vmatpush1.bf16.msra.mxu0 %v952
    %1323 = vmatprep.subr.bf16.mxu0 %v957
    %1324 = vmatpush1.bf16.msra.mxu0 %v956
    %1325 = vmatprep.subr.bf16.mxu0 %v961
    %1326 = vmatpush1.bf16.msra.mxu0 %v960
    %1327 = vmatprep.subr.bf16.mxu0 %v965
    %1328 = vmatpush1.bf16.msra.mxu0 %v964
    %1329 = vmatprep.subr.bf16.mxu0 %v969
    %1330 = vmatpush1.bf16.msra.mxu0 %v968
    %1331 = vmatprep.subr.bf16.mxu0 %v973
    %1332 = vmatpush1.bf16.msra.mxu0 %v972
    %1333 = vmatprep.subr.bf16.mxu0 %v977
    %1334 = vmatpush1.bf16.msra.mxu0 %v976
    %1335 = vmatprep.subr.bf16.mxu0 %v981
    %1336 = vmatpush1.bf16.msra.mxu0 %v980
    %1337 = vmatprep.subr.bf16.mxu0 %v985
    %1338 = vmatpush1.bf16.msra.mxu0 %v984
    %1339 = vmatprep.subr.bf16.mxu0 %v989
    %1340 = vmatpush1.bf16.msra.mxu0 %v988
    %1341 = vmatprep.subr.bf16.mxu0 %v993
    %1342 = vmatpush1.bf16.msra.mxu0 %v992
    %1343 = vmatprep.subr.bf16.mxu0 %v997
    %1344 = vmatpush1.bf16.msra.mxu0 %v996
    %1345 = vmatprep.subr.bf16.mxu0 %v1001
    %1346 = vmatpush1.bf16.msra.mxu0 %v1000
    %1347 = vmatprep.mubr.bf16.mxu0 %v66
    %1348 = vmatmul.mubr.bf16.gmra.mrb[0].mxu0 %v65
    %v1349 = vpop.f32.mrb[0].mxu0
    %v1350 = vadd.f32 %v1307, %v1349
    %v1351 = vpop.f32.mrb[0].mxu0
    %v1352 = vadd.f32 %v1309, %v1351
    %v1353 = vpop.f32.mrb[0].mxu0
    %v1354 = vadd.f32 %v1311, %v1353
    %v1355 = vpop.f32.mrb[0].mxu0
    %v1356 = vadd.f32 %v1313, %v1355
    %1357 = vdwg.mxu0
    %1358 = vmatprep.subr.bf16.mxu0 %v1005
    %1359 = vmatpush1.bf16.msra.mxu0 %v1004
    %1360 = vmatprep.subr.bf16.mxu0 %v1009
    %1361 = vmatpush1.bf16.msra.mxu0 %v1008
    %1362 = vmatprep.subr.bf16.mxu0 %v1013
    %1363 = vmatpush1.bf16.msra.mxu0 %v1012
    %1364 = vmatprep.subr.bf16.mxu0 %v1017
    %1365 = vmatpush1.bf16.msra.mxu0 %v1016
    %1366 = vmatprep.subr.bf16.mxu0 %v1021
    %1367 = vmatpush1.bf16.msra.mxu0 %v1020
    %1368 = vmatprep.subr.bf16.mxu0 %v1025
    %1369 = vmatpush1.bf16.msra.mxu0 %v1024
    %1370 = vmatprep.subr.bf16.mxu0 %v1029
    %1371 = vmatpush1.bf16.msra.mxu0 %v1028
    %1372 = vmatprep.subr.bf16.mxu0 %v1033
    %1373 = vmatpush1.bf16.msra.mxu0 %v1032
    %1374 = vmatprep.subr.bf16.mxu0 %v1037
    %1375 = vmatpush1.bf16.msra.mxu0 %v1036
    %1376 = vmatprep.subr.bf16.mxu0 %v1041
    %1377 = vmatpush1.bf16.msra.mxu0 %v1040
    %1378 = vmatprep.subr.bf16.mxu0 %v1045
    %1379 = vmatpush1.bf16.msra.mxu0 %v1044
    %1380 = vmatprep.subr.bf16.mxu0 %v1049
    %1381 = vmatpush1.bf16.msra.mxu0 %v1048
    %1382 = vmatprep.subr.bf16.mxu0 %v1053
    %1383 = vmatpush1.bf16.msra.mxu0 %v1052
    %1384 = vmatprep.subr.bf16.mxu0 %v1057
    %1385 = vmatpush1.bf16.msra.mxu0 %v1056
    %1386 = vmatprep.subr.bf16.mxu0 %v1061
    %1387 = vmatpush1.bf16.msra.mxu0 %v1060
    %1388 = vmatprep.subr.bf16.mxu0 %v1065
    %1389 = vmatpush1.bf16.msra.mxu0 %v1064
    %1390 = vmatprep.mubr.bf16.mxu0 %v68
    %1391 = vmatmul.mubr.bf16.gmra.mrb[0].mxu0 %v67
    %v1392 = vpop.f32.mrb[0].mxu0
    %v1393 = vadd.f32 %v1350, %v1392
    %v1394 = vpop.f32.mrb[0].mxu0
    %v1395 = vadd.f32 %v1352, %v1394
    %v1396 = vpop.f32.mrb[0].mxu0
    %v1397 = vadd.f32 %v1354, %v1396
    %v1398 = vpop.f32.mrb[0].mxu0
    %v1399 = vadd.f32 %v1356, %v1398
    %1400 = vdwg.mxu0
    %1401 = vmatprep.subr.bf16.mxu0 %v1069
    %1402 = vmatpush1.bf16.msra.mxu0 %v1068
    %1403 = vmatprep.subr.bf16.mxu0 0
    %1404 = vmatpush1.bf16.msra.mxu0 0
    %1405 = vmatprep.subr.bf16.mxu0 0
    %1406 = vmatpush1.bf16.msra.mxu0 0
    %1407 = vmatprep.subr.bf16.mxu0 0
    %1408 = vmatpush1.bf16.msra.mxu0 0
    %1409 = vmatprep.subr.bf16.mxu0 0
    %1410 = vmatpush1.bf16.msra.mxu0 0
    %1411 = vmatprep.subr.bf16.mxu0 0
    %1412 = vmatpush1.bf16.msra.mxu0 0
    %1413 = vmatprep.subr.bf16.mxu0 0
    %1414 = vmatpush1.bf16.msra.mxu0 0
    %1415 = vmatprep.subr.bf16.mxu0 0
    %1416 = vmatpush1.bf16.msra.mxu0 0
    %1417 = vmatprep.subr.bf16.mxu0 0
    %1418 = vmatpush1.bf16.msra.mxu0 0
    %1419 = vmatprep.subr.bf16.mxu0 0
    %1420 = vmatpush1.bf16.msra.mxu0 0
    %1421 = vmatprep.subr.bf16.mxu0 0
    %1422 = vmatpush1.bf16.msra.mxu0 0
    %1423 = vmatprep.subr.bf16.mxu0 0
    %1424 = vmatpush1.bf16.msra.mxu0 0
    %1425 = vmatprep.subr.bf16.mxu0 0
    %1426 = vmatpush1.bf16.msra.mxu0 0
    %1427 = vmatprep.subr.bf16.mxu0 0
    %1428 = vmatpush1.bf16.msra.mxu0 0
    %1429 = vmatprep.subr.bf16.mxu0 0
    %1430 = vmatpush1.bf16.msra.mxu0 0
    %1431 = vmatprep.subr.bf16.mxu0 0
    %1432 = vmatpush1.bf16.msra.mxu0 0
    %1433 = vmatprep.mubr.bf16.mxu0 0
    %1434 = vmatmul.mubr.bf16.gmra.mrb[0].mxu0 %v1270
    %v1435 = vpop.f32.mrb[0].mxu0
    %v1436 = vadd.f32 %v1393, %v1435
    %v1437 = vpop.f32.mrb[0].mxu0
    %v1438 = vadd.f32 %v1395, %v1437
    %v1439 = vpop.f32.mrb[0].mxu0
    %v1440 = vadd.f32 %v1397, %v1439
    %v1441 = vpop.f32.mrb[0].mxu0
    %v1442 = vadd.f32 %v1399, %v1441
    %1443 = vdwg.mxu0
    %1444 = vmatprep.subr.bf16.mxu0 %v879
    %1445 = vmatpush1.bf16.msra.mxu0 %v878
    %1446 = vmatprep.subr.bf16.mxu0 %v883
    %1447 = vmatpush1.bf16.msra.mxu0 %v882
    %1448 = vmatprep.subr.bf16.mxu0 %v887
    %1449 = vmatpush1.bf16.msra.mxu0 %v886
    %1450 = vmatprep.subr.bf16.mxu0 %v891
    %1451 = vmatpush1.bf16.msra.mxu0 %v890
    %1452 = vmatprep.subr.bf16.mxu0 %v895
    %1453 = vmatpush1.bf16.msra.mxu0 %v894
    %1454 = vmatprep.subr.bf16.mxu0 %v899
    %1455 = vmatpush1.bf16.msra.mxu0 %v898
    %1456 = vmatprep.subr.bf16.mxu0 %v903
    %1457 = vmatpush1.bf16.msra.mxu0 %v902
    %1458 = vmatprep.subr.bf16.mxu0 %v907
    %1459 = vmatpush1.bf16.msra.mxu0 %v906
    %1460 = vmatprep.subr.bf16.mxu0 %v911
    %1461 = vmatpush1.bf16.msra.mxu0 %v910
    %1462 = vmatprep.subr.bf16.mxu0 %v915
    %1463 = vmatpush1.bf16.msra.mxu0 %v914
    %1464 = vmatprep.subr.bf16.mxu0 %v919
    %1465 = vmatpush1.bf16.msra.mxu0 %v918
    %1466 = vmatprep.subr.bf16.mxu0 %v923
    %1467 = vmatpush1.bf16.msra.mxu0 %v922
    %1468 = vmatprep.subr.bf16.mxu0 %v927
    %1469 = vmatpush1.bf16.msra.mxu0 %v926
    %1470 = vmatprep.subr.bf16.mxu0 %v931
    %1471 = vmatpush1.bf16.msra.mxu0 %v930
    %1472 = vmatprep.subr.bf16.mxu0 %v935
    %1473 = vmatpush1.bf16.msra.mxu0 %v934
    %1474 = vmatprep.subr.bf16.mxu0 %v939
    %1475 = vmatpush1.bf16.msra.mxu0 %v938
    %1476 = vmatprep.mubr.bf16.mxu0 %v64
    %1477 = vmatmul.mubr.bf16.gmra.mrb[0].mxu0 %v63
    %v1478 = vpop.f32.mrb[0].mxu0
    %v1479 = vadd.f32 %v279, %v1478
    %v1480 = vpop.f32.mrb[0].mxu0
    %v1481 = vadd.f32 %v283, %v1480
    %v1482 = vpop.f32.mrb[0].mxu0
    %v1483 = vadd.f32 %v279, %v1482
    %v1484 = vpop.f32.mrb[0].mxu0
    %v1485 = vadd.f32 %v283, %v1484
    %1486 = vdwg.mxu0
    %1487 = vmatprep.subr.bf16.mxu0 %v943
    %1488 = vmatpush1.bf16.msra.mxu0 %v942
    %1489 = vmatprep.subr.bf16.mxu0 %v947
    %1490 = vmatpush1.bf16.msra.mxu0 %v946
    %1491 = vmatprep.subr.bf16.mxu0 %v951
    %1492 = vmatpush1.bf16.msra.mxu0 %v950
    %1493 = vmatprep.subr.bf16.mxu0 %v955
    %1494 = vmatpush1.bf16.msra.mxu0 %v954
    %1495 = vmatprep.subr.bf16.mxu0 %v959
    %1496 = vmatpush1.bf16.msra.mxu0 %v958
    %1497 = vmatprep.subr.bf16.mxu0 %v963
    %1498 = vmatpush1.bf16.msra.mxu0 %v962
    %1499 = vmatprep.subr.bf16.mxu0 %v967
    %1500 = vmatpush1.bf16.msra.mxu0 %v966
    %1501 = vmatprep.subr.bf16.mxu0 %v971
    %1502 = vmatpush1.bf16.msra.mxu0 %v970
    %1503 = vmatprep.subr.bf16.mxu0 %v975
    %1504 = vmatpush1.bf16.msra.mxu0 %v974
    %1505 = vmatprep.subr.bf16.mxu0 %v979
    %1506 = vmatpush1.bf16.msra.mxu0 %v978
    %1507 = vmatprep.subr.bf16.mxu0 %v983
    %1508 = vmatpush1.bf16.msra.mxu0 %v982
    %1509 = vmatprep.subr.bf16.mxu0 %v987
    %1510 = vmatpush1.bf16.msra.mxu0 %v986
    %1511 = vmatprep.subr.bf16.mxu0 %v991
    %1512 = vmatpush1.bf16.msra.mxu0 %v990
    %1513 = vmatprep.subr.bf16.mxu0 %v995
    %1514 = vmatpush1.bf16.msra.mxu0 %v994
    %1515 = vmatprep.subr.bf16.mxu0 %v999
    %1516 = vmatpush1.bf16.msra.mxu0 %v998
    %1517 = vmatprep.subr.bf16.mxu0 %v1003
    %1518 = vmatpush1.bf16.msra.mxu0 %v1002
    %1519 = vmatprep.mubr.bf16.mxu0 %v66
    %1520 = vmatmul.mubr.bf16.gmra.mrb[0].mxu0 %v65
    %v1521 = vpop.f32.mrb[0].mxu0
    %v1522 = vadd.f32 %v1479, %v1521
    %v1523 = vpop.f32.mrb[0].mxu0
    %v1524 = vadd.f32 %v1481, %v1523
    %v1525 = vpop.f32.mrb[0].mxu0
    %v1526 = vadd.f32 %v1483, %v1525
    %v1527 = vpop.f32.mrb[0].mxu0
    %v1528 = vadd.f32 %v1485, %v1527
    %1529 = vdwg.mxu0
    %1530 = vmatprep.subr.bf16.mxu0 %v1007
    %1531 = vmatpush1.bf16.msra.mxu0 %v1006
    %1532 = vmatprep.subr.bf16.mxu0 %v1011
    %1533 = vmatpush1.bf16.msra.mxu0 %v1010
    %1534 = vmatprep.subr.bf16.mxu0 %v1015
    %1535 = vmatpush1.bf16.msra.mxu0 %v1014
    %1536 = vmatprep.subr.bf16.mxu0 %v1019
    %1537 = vmatpush1.bf16.msra.mxu0 %v1018
    %1538 = vmatprep.subr.bf16.mxu0 %v1023
    %1539 = vmatpush1.bf16.msra.mxu0 %v1022
    %1540 = vmatprep.subr.bf16.mxu0 %v1027
    %1541 = vmatpush1.bf16.msra.mxu0 %v1026
    %1542 = vmatprep.subr.bf16.mxu0 %v1031
    %1543 = vmatpush1.bf16.msra.mxu0 %v1030
    %1544 = vmatprep.subr.bf16.mxu0 %v1035
    %1545 = vmatpush1.bf16.msra.mxu0 %v1034
    %1546 = vmatprep.subr.bf16.mxu0 %v1039
    %1547 = vmatpush1.bf16.msra.mxu0 %v1038
    %1548 = vmatprep.subr.bf16.mxu0 %v1043
    %1549 = vmatpush1.bf16.msra.mxu0 %v1042
    %1550 = vmatprep.subr.bf16.mxu0 %v1047
    %1551 = vmatpush1.bf16.msra.mxu0 %v1046
    %1552 = vmatprep.subr.bf16.mxu0 %v1051
    %1553 = vmatpush1.bf16.msra.mxu0 %v1050
    %1554 = vmatprep.subr.bf16.mxu0 %v1055
    %1555 = vmatpush1.bf16.msra.mxu0 %v1054
    %1556 = vmatprep.subr.bf16.mxu0 %v1059
    %1557 = vmatpush1.bf16.msra.mxu0 %v1058
    %1558 = vmatprep.subr.bf16.mxu0 %v1063
    %1559 = vmatpush1.bf16.msra.mxu0 %v1062
    %1560 = vmatprep.subr.bf16.mxu0 %v1067
    %1561 = vmatpush1.bf16.msra.mxu0 %v1066
    %1562 = vmatprep.mubr.bf16.mxu0 %v68
    %1563 = vmatmul.mubr.bf16.gmra.mrb[0].mxu0 %v67
    %v1564 = vpop.f32.mrb[0].mxu0
    %v1565 = vadd.f32 %v1522, %v1564
    %v1566 = vpop.f32.mrb[0].mxu0
    %v1567 = vadd.f32 %v1524, %v1566
    %v1568 = vpop.f32.mrb[0].mxu0
    %v1569 = vadd.f32 %v1526, %v1568
    %v1570 = vpop.f32.mrb[0].mxu0
    %v1571 = vadd.f32 %v1528, %v1570
    %1572 = vdwg.mxu0
    %1573 = vmatprep.subr.bf16.mxu0 %v1071
    %1574 = vmatpush1.bf16.msra.mxu0 %v1070
    %1575 = vmatprep.subr.bf16.mxu0 0
    %1576 = vmatpush1.bf16.msra.mxu0 0
    %1577 = vmatprep.subr.bf16.mxu0 0
    %1578 = vmatpush1.bf16.msra.mxu0 0
    %1579 = vmatprep.subr.bf16.mxu0 0
    %1580 = vmatpush1.bf16.msra.mxu0 0
    %1581 = vmatprep.subr.bf16.mxu0 0
    %1582 = vmatpush1.bf16.msra.mxu0 0
    %1583 = vmatprep.subr.bf16.mxu0 0
    %1584 = vmatpush1.bf16.msra.mxu0 0
    %1585 = vmatprep.subr.bf16.mxu0 0
    %1586 = vmatpush1.bf16.msra.mxu0 0
    %1587 = vmatprep.subr.bf16.mxu0 0
    %1588 = vmatpush1.bf16.msra.mxu0 0
    %1589 = vmatprep.subr.bf16.mxu0 0
    %1590 = vmatpush1.bf16.msra.mxu0 0
    %1591 = vmatprep.subr.bf16.mxu0 0
    %1592 = vmatpush1.bf16.msra.mxu0 0
    %1593 = vmatprep.subr.bf16.mxu0 0
    %1594 = vmatpush1.bf16.msra.mxu0 0
    %1595 = vmatprep.subr.bf16.mxu0 0
    %1596 = vmatpush1.bf16.msra.mxu0 0
    %1597 = vmatprep.subr.bf16.mxu0 0
    %1598 = vmatpush1.bf16.msra.mxu0 0
    %1599 = vmatprep.subr.bf16.mxu0 0
    %1600 = vmatpush1.bf16.msra.mxu0 0
    %1601 = vmatprep.subr.bf16.mxu0 0
    %1602 = vmatpush1.bf16.msra.mxu0 0
    %1603 = vmatprep.subr.bf16.mxu0 0
    %1604 = vmatpush1.bf16.msra.mxu0 0
    %1605 = vmatprep.mubr.bf16.mxu0 0
    %1606 = vmatmul.mubr.bf16.gmra.mrb[0].mxu0 %v1270
    %v1607 = vpop.f32.mrb[0].mxu0
    %v1608 = vadd.f32 %v1565, %v1607
    %v1609 = vpop.f32.mrb[0].mxu0
    %v1610 = vadd.f32 %v1567, %v1609
    %v1611 = vpop.f32.mrb[0].mxu0
    %v1612 = vadd.f32 %v1569, %v1611
    %v1613 = vpop.f32.mrb[0].mxu0
    %v1614 = vadd.f32 %v1571, %v1613
    %1615 = vdwg.mxu0
    %v1616 = vmax.f32 %v1436, 0.0
    %v1617 = vmax.f32 %v1438, 0.0
    %v1618 = vmax.f32 %v1608, 0.0
    %v1619 = vmax.f32 %v1610, 0.0
    %v1620 = vmax.f32 %v1440, 0.0
    %v1621 = vmax.f32 %v1442, 0.0
    %v1622 = vmax.f32 %v1612, 0.0
    %v1623 = vmax.f32 %v1614, 0.0
    %v1624 = vpack.c.bf16 %v1620, %v1616
    %v1625 = vpack.c.bf16 %v1621, %v1617
    %v1626 = vpack.c.bf16 %v1622, %v1618
    %v1627 = vpack.c.bf16 %v1623, %v1619
    %v1628 = vld [vmem:[#allocation4] sm:$0xf]
    %v1629 = vld [vmem:[#allocation4 + $0x4] sm:$0xf]
    %v1630 = vld [vmem:[#allocation4 + $0x8] sm:$0xf]
    %v1631 = vld [vmem:[#allocation4 + $0xc] sm:$0xf]
    %v1632 = vld [vmem:[#allocation4 + $0x10] sm:$0xf]
    %v1633 = vld [vmem:[#allocation4 + $0x14] sm:$0xf]
    %v1634 = vld [vmem:[#allocation4 + $0x18] sm:$0xf]
    %v1635 = vld [vmem:[#allocation4 + $0x1c] sm:$0xf]
    %v1636 = vld [vmem:[#allocation4 + $0x20] sm:$0xf]
    %v1637 = vld [vmem:[#allocation4 + $0x24] sm:$0xf]
    %v1638 = vld [vmem:[#allocation4 + $0x28] sm:$0xf]
    %v1639 = vld [vmem:[#allocation4 + $0x2c] sm:$0xf]
    %v1640 = vld [vmem:[#allocation4 + $0x30] sm:$0xf]
    %v1641 = vld [vmem:[#allocation4 + $0x34] sm:$0xf]
    %v1642 = vld [vmem:[#allocation4 + $0x38] sm:$0xf]
    %v1643 = vld [vmem:[#allocation4 + $0x3c] sm:$0xf]
    %v1644 = vld [vmem:[#allocation4 + $0x40] sm:$0xf]
    %v1645 = vld [vmem:[#allocation4 + $0x44] sm:$0xf]
    %v1646 = vld [vmem:[#allocation4 + $0x48] sm:$0xf]
    %v1647 = vld [vmem:[#allocation4 + $0x4c] sm:$0xf]
    %v1648 = vld [vmem:[#allocation4 + $0x50] sm:$0xf]
    %v1649 = vld [vmem:[#allocation4 + $0x54] sm:$0xf]
    %v1650 = vld [vmem:[#allocation4 + $0x58] sm:$0xf]
    %v1651 = vld [vmem:[#allocation4 + $0x5c] sm:$0xf]
    %v1652 = vld [vmem:[#allocation4 + $0x60] sm:$0xf]
    %v1653 = vld [vmem:[#allocation4 + $0x64] sm:$0xf]
    %v1654 = vld [vmem:[#allocation4 + $0x68] sm:$0xf]
    %v1655 = vld [vmem:[#allocation4 + $0x6c] sm:$0xf]
    %v1656 = vld [vmem:[#allocation4 + $0x70] sm:$0xf]
    %v1657 = vld [vmem:[#allocation4 + $0x74] sm:$0xf]
    %v1658 = vld [vmem:[#allocation4 + $0x78] sm:$0xf]
    %v1659 = vld [vmem:[#allocation4 + $0x7c] sm:$0xf]
    %v1660 = vld [vmem:[#allocation4 + $0x80] sm:$0xf]
    %v1661 = vld [vmem:[#allocation4 + $0x84] sm:$0xf]
    %v1662 = vld [vmem:[#allocation4 + $0x88] sm:$0xf]
    %v1663 = vld [vmem:[#allocation4 + $0x8c] sm:$0xf]
    %v1664 = vld [vmem:[#allocation4 + $0x90] sm:$0xf]
    %v1665 = vld [vmem:[#allocation4 + $0x94] sm:$0xf]
    %v1666 = vld [vmem:[#allocation4 + $0x98] sm:$0xf]
    %v1667 = vld [vmem:[#allocation4 + $0x9c] sm:$0xf]
    %v1668 = vld [vmem:[#allocation4 + $0xa0] sm:$0xf]
    %v1669 = vld [vmem:[#allocation4 + $0xa4] sm:$0xf]
    %v1670 = vld [vmem:[#allocation4 + $0xa8] sm:$0xf]
    %v1671 = vld [vmem:[#allocation4 + $0xac] sm:$0xf]
    %v1672 = vld [vmem:[#allocation4 + $0xb0] sm:$0xf]
    %v1673 = vld [vmem:[#allocation4 + $0xb4] sm:$0xf]
    %v1674 = vld [vmem:[#allocation4 + $0xb8] sm:$0xf]
    %v1675 = vld [vmem:[#allocation4 + $0xbc] sm:$0xf]
    %v1676 = vld [vmem:[#allocation4 + $0xc0] sm:$0xf]
    %v1677 = vld [vmem:[#allocation4 + $0xc4] sm:$0xf]
    %v1678 = vld [vmem:[#allocation4 + $0xc8] sm:$0xf]
    %v1679 = vld [vmem:[#allocation4 + $0xcc] sm:$0xf]
    %v1680 = vld [vmem:[#allocation4 + $0xd0] sm:$0xf]
    %v1681 = vld [vmem:[#allocation4 + $0xd4] sm:$0xf]
    %v1682 = vld [vmem:[#allocation4 + $0xd8] sm:$0xf]
    %v1683 = vld [vmem:[#allocation4 + $0xdc] sm:$0xf]
    %v1684 = vld [vmem:[#allocation4 + $0xe0] sm:$0xf]
    %v1685 = vld [vmem:[#allocation4 + $0xe4] sm:$0xf]
    %v1686 = vld [vmem:[#allocation4 + $0xe8] sm:$0xf]
    %v1687 = vld [vmem:[#allocation4 + $0xec] sm:$0xf]
    %v1688 = vld [vmem:[#allocation4 + $0xf0] sm:$0xf]
    %v1689 = vld [vmem:[#allocation4 + $0xf4] sm:$0xf]
    %v1690 = vld [vmem:[#allocation4 + $0xf8] sm:$0xf]
    %v1691 = vld [vmem:[#allocation4 + $0xfc] sm:$0xf]
    %v1692 = vld [vmem:[%s4] sm:$0x1]
    %v1694 = vlaneseq
    %v1695 = vshrl.u32 %v1694, 7
    %v1696 = vsub.s32 0, %v1695
    %v1697 = vrot.slane %v1692, %v1696
    %v1763 = vunpack.c.l.b16 %v1628
    %v1764 = vunpack.c.l.b16 %v1629
    %v1765 = vunpack.c.l.b16 %v1630
    %v1766 = vunpack.c.l.b16 %v1631
    %v1767 = vunpack.c.l.b16 %v1632
    %v1768 = vunpack.c.l.b16 %v1633
    %v1769 = vunpack.c.l.b16 %v1634
    %v1770 = vunpack.c.l.b16 %v1635
    %v1771 = vunpack.c.l.b16 %v1636
    %v1772 = vunpack.c.l.b16 %v1637
    %v1773 = vunpack.c.l.b16 %v1638
    %v1774 = vunpack.c.l.b16 %v1639
    %v1775 = vunpack.c.l.b16 %v1640
    %v1776 = vunpack.c.l.b16 %v1641
    %v1777 = vunpack.c.l.b16 %v1642
    %v1778 = vunpack.c.l.b16 %v1643
    %v1779 = vunpack.c.l.b16 %v1644
    %v1780 = vunpack.c.l.b16 %v1645
    %v1781 = vunpack.c.l.b16 %v1646
    %v1782 = vunpack.c.l.b16 %v1647
    %v1783 = vunpack.c.l.b16 %v1648
    %v1784 = vunpack.c.l.b16 %v1649
    %v1785 = vunpack.c.l.b16 %v1650
    %v1786 = vunpack.c.l.b16 %v1651
    %v1787 = vunpack.c.l.b16 %v1652
    %v1788 = vunpack.c.l.b16 %v1653
    %v1789 = vunpack.c.l.b16 %v1654
    %v1790 = vunpack.c.l.b16 %v1655
    %v1791 = vunpack.c.l.b16 %v1656
    %v1792 = vunpack.c.l.b16 %v1657
    %v1793 = vunpack.c.l.b16 %v1658
    %v1794 = vunpack.c.l.b16 %v1659
    %v1795 = vunpack.c.l.b16 %v1660
    %v1796 = vunpack.c.l.b16 %v1661
    %v1797 = vunpack.c.l.b16 %v1662
    %v1798 = vunpack.c.l.b16 %v1663
    %v1799 = vunpack.c.l.b16 %v1664
    %v1800 = vunpack.c.l.b16 %v1665
    %v1801 = vunpack.c.l.b16 %v1666
    %v1802 = vunpack.c.l.b16 %v1667
    %v1803 = vunpack.c.l.b16 %v1668
    %v1804 = vunpack.c.l.b16 %v1669
    %v1805 = vunpack.c.l.b16 %v1670
    %v1806 = vunpack.c.l.b16 %v1671
    %v1807 = vunpack.c.l.b16 %v1672
    %v1808 = vunpack.c.l.b16 %v1673
    %v1809 = vunpack.c.l.b16 %v1674
    %v1810 = vunpack.c.l.b16 %v1675
    %v1811 = vunpack.c.l.b16 %v1676
    %v1812 = vunpack.c.l.b16 %v1677
    %v1813 = vunpack.c.l.b16 %v1678
    %v1814 = vunpack.c.l.b16 %v1679
    %v1815 = vunpack.c.l.b16 %v1680
    %v1816 = vunpack.c.l.b16 %v1681
    %v1817 = vunpack.c.l.b16 %v1682
    %v1818 = vunpack.c.l.b16 %v1683
    %v1819 = vunpack.c.l.b16 %v1684
    %v1820 = vunpack.c.l.b16 %v1685
    %v1821 = vunpack.c.l.b16 %v1686
    %v1822 = vunpack.c.l.b16 %v1687
    %v1823 = vunpack.c.l.b16 %v1688
    %v1824 = vunpack.c.l.b16 %v1689
    %v1825 = vunpack.c.l.b16 %v1690
    %v1826 = vunpack.c.l.b16 %v1691
    %v1827 = vpack.c.b16 %v1764, %v1763
    %v1828 = vpack.c.b16 %v1766, %v1765
    %v1829 = vpack.c.b16 %v1768, %v1767
    %v1830 = vpack.c.b16 %v1770, %v1769
    %v1831 = vpack.c.b16 %v1772, %v1771
    %v1832 = vpack.c.b16 %v1774, %v1773
    %v1833 = vpack.c.b16 %v1776, %v1775
    %v1834 = vpack.c.b16 %v1778, %v1777
    %v1835 = vpack.c.b16 %v1780, %v1779
    %v1836 = vpack.c.b16 %v1782, %v1781
    %v1837 = vpack.c.b16 %v1784, %v1783
    %v1838 = vpack.c.b16 %v1786, %v1785
    %v1839 = vpack.c.b16 %v1788, %v1787
    %v1840 = vpack.c.b16 %v1790, %v1789
    %v1841 = vpack.c.b16 %v1792, %v1791
    %v1842 = vpack.c.b16 %v1794, %v1793
    %v1843 = vpack.c.b16 %v1796, %v1795
    %v1844 = vpack.c.b16 %v1798, %v1797
    %v1845 = vpack.c.b16 %v1800, %v1799
    %v1846 = vpack.c.b16 %v1802, %v1801
    %v1847 = vpack.c.b16 %v1804, %v1803
    %v1848 = vpack.c.b16 %v1806, %v1805
    %v1849 = vpack.c.b16 %v1808, %v1807
    %v1850 = vpack.c.b16 %v1810, %v1809
    %v1851 = vpack.c.b16 %v1812, %v1811
    %v1852 = vpack.c.b16 %v1814, %v1813
    %v1853 = vpack.c.b16 %v1816, %v1815
    %v1854 = vpack.c.b16 %v1818, %v1817
    %v1855 = vpack.c.b16 %v1820, %v1819
    %v1856 = vpack.c.b16 %v1822, %v1821
    %v1857 = vpack.c.b16 %v1824, %v1823
    %v1858 = vpack.c.b16 %v1826, %v1825
    %1891 = vmatprep.subr.bf16.mxu0 0
    %1892 = vmatpush1.bf16.msra.mxu0 %v1827
    %1893 = vmatprep.subr.bf16.mxu0 0
    %1894 = vmatpush1.bf16.msra.mxu0 %v1828
    %1895 = vmatprep.subr.bf16.mxu0 0
    %1896 = vmatpush1.bf16.msra.mxu0 %v1829
    %1897 = vmatprep.subr.bf16.mxu0 0
    %1898 = vmatpush1.bf16.msra.mxu0 %v1830
    %1899 = vmatprep.subr.bf16.mxu0 0
    %1900 = vmatpush1.bf16.msra.mxu0 %v1831
    %1901 = vmatprep.subr.bf16.mxu0 0
    %1902 = vmatpush1.bf16.msra.mxu0 %v1832
    %1903 = vmatprep.subr.bf16.mxu0 0
    %1904 = vmatpush1.bf16.msra.mxu0 %v1833
    %1905 = vmatprep.subr.bf16.mxu0 0
    %1906 = vmatpush1.bf16.msra.mxu0 %v1834
    %1907 = vmatprep.subr.bf16.mxu0 0
    %1908 = vmatpush1.bf16.msra.mxu0 %v1835
    %1909 = vmatprep.subr.bf16.mxu0 0
    %1910 = vmatpush1.bf16.msra.mxu0 %v1836
    %1911 = vmatprep.subr.bf16.mxu0 0
    %1912 = vmatpush1.bf16.msra.mxu0 %v1837
    %1913 = vmatprep.subr.bf16.mxu0 0
    %1914 = vmatpush1.bf16.msra.mxu0 %v1838
    %1915 = vmatprep.subr.bf16.mxu0 0
    %1916 = vmatpush1.bf16.msra.mxu0 %v1839
    %1917 = vmatprep.subr.bf16.mxu0 0
    %1918 = vmatpush1.bf16.msra.mxu0 %v1840
    %1919 = vmatprep.subr.bf16.mxu0 0
    %1920 = vmatpush1.bf16.msra.mxu0 %v1841
    %1921 = vmatprep.subr.bf16.mxu0 0
    %1922 = vmatpush1.bf16.msra.mxu0 %v1842
    %1923 = vmatprep.mubr.bf16.mxu0 %v1625
    %1924 = vmatmul.mubr.bf16.gmra.mrb[0].mxu0 %v1624
    %v1925 = vpop.f32.mrb[0].mxu0
    %v1926 = vadd.f32 %v1697, %v1925
    %v1927 = vpop.f32.mrb[0].mxu0
    %v1928 = vpop.f32.mrb[0].mxu0
    %v1929 = vadd.f32 %v1697, %v1928
    %v1930 = vpop.f32.mrb[0].mxu0
    %1931 = vdwg.mxu0
    %1932 = vmatprep.subr.bf16.mxu0 0
    %1933 = vmatpush1.bf16.msra.mxu0 %v1843
    %1934 = vmatprep.subr.bf16.mxu0 0
    %1935 = vmatpush1.bf16.msra.mxu0 %v1844
    %1936 = vmatprep.subr.bf16.mxu0 0
    %1937 = vmatpush1.bf16.msra.mxu0 %v1845
    %1938 = vmatprep.subr.bf16.mxu0 0
    %1939 = vmatpush1.bf16.msra.mxu0 %v1846
    %1940 = vmatprep.subr.bf16.mxu0 0
    %1941 = vmatpush1.bf16.msra.mxu0 %v1847
    %1942 = vmatprep.subr.bf16.mxu0 0
    %1943 = vmatpush1.bf16.msra.mxu0 %v1848
    %1944 = vmatprep.subr.bf16.mxu0 0
    %1945 = vmatpush1.bf16.msra.mxu0 %v1849
    %1946 = vmatprep.subr.bf16.mxu0 0
    %1947 = vmatpush1.bf16.msra.mxu0 %v1850
    %1948 = vmatprep.subr.bf16.mxu0 0
    %1949 = vmatpush1.bf16.msra.mxu0 %v1851
    %1950 = vmatprep.subr.bf16.mxu0 0
    %1951 = vmatpush1.bf16.msra.mxu0 %v1852
    %1952 = vmatprep.subr.bf16.mxu0 0
    %1953 = vmatpush1.bf16.msra.mxu0 %v1853
    %1954 = vmatprep.subr.bf16.mxu0 0
    %1955 = vmatpush1.bf16.msra.mxu0 %v1854
    %1956 = vmatprep.subr.bf16.mxu0 0
    %1957 = vmatpush1.bf16.msra.mxu0 %v1855
    %1958 = vmatprep.subr.bf16.mxu0 0
    %1959 = vmatpush1.bf16.msra.mxu0 %v1856
    %1960 = vmatprep.subr.bf16.mxu0 0
    %1961 = vmatpush1.bf16.msra.mxu0 %v1857
    %1962 = vmatprep.subr.bf16.mxu0 0
    %1963 = vmatpush1.bf16.msra.mxu0 %v1858
    %1964 = vmatprep.mubr.bf16.mxu0 %v1627
    %1965 = vmatmul.mubr.bf16.gmra.mrb[0].mxu0 %v1626
    %v1966 = vpop.f32.mrb[0].mxu0
    %v1967 = vadd.f32 %v1926, %v1966
    %v1968 = vpop.f32.mrb[0].mxu0
    %v1969 = vpop.f32.mrb[0].mxu0
    %v1970 = vadd.f32 %v1929, %v1969
    %v1971 = vpop.f32.mrb[0].mxu0
    %1972 = vdwg.mxu0
    %1973 = vst [vmem:[%s5] sm:$0xff] %v1967
    %1974 = vst [vmem:[%s5 + $0x8] sm:$0xff] %v1970
    // Predicated region
    $region30: #{simple_dnn_forward.1} parent=1 // pred_check
      _
    $region31: #{simple_dnn_forward.1} parent=1 // pred_check_branch
      %1976 = sbr.rel (0) target = $region33
    $region32: #{simple_dnn_forward.1} parent=1 // pred_region
      _
    $region33: #{simple_dnn_forward.1} parent=1 // pred_fallthru
      _
    // Predicated region
    $region34: #{simple_dnn_forward.1} parent=1 // pred_check
      _
    $region35: #{simple_dnn_forward.1} parent=1 // pred_check_branch
      %1978 = sbr.rel (0) target = $region37
    $region36: #{simple_dnn_forward.1} parent=1 // pred_region
      _
    $region37: #{simple_dnn_forward.1} parent=1 // pred_fallthru
      _
    %1979 = vsyncpa [#allocation3], 1
    %1980 = vsyncpa [#allocation5], 1

</llo_original>
